<compile_context>
chip_gen: v6e
topology: v6e:2x2x1
jax: 0.10.0
libtpu: 0.0.40
codegen_flags: <defaults>
</compile_context>

<pallas_src>
import functools

import jax
import jax.numpy as jnp
import numpy as np
from jax.experimental import pallas as pl
from jax.experimental.pallas import tpu as pltpu

EPS = 1e-5
# MXU operand dtype (accumulation stays f32).  bf16 is the native MXU input on
# v6e/v7x; on v5e only the matmul operands are bf16, epilogue math stays f32.
MATMUL_DTYPE = jnp.bfloat16


# --------------------------- kernel bodies ----------------------------------
def _conv_body(xin, w_ref, y_ref, stats_ref, *, H, W, Cin, Cout):
    """Shared conv + BN-partials body.

    xin:       (H, W*Cin) f32 row-packed image (already BN/ReLU'd if fused)
    w_ref:     (3, W*Cin, W*Cout) banded conv weights (one matrix per kh)
    y_ref:     (1, H, W*Cout)  pre-BN conv output (lane-dense store)
    stats_ref: (1, 2, W*Cout)  per-image [sum, sum-of-squares] per output lane
    """
    # Height padding (pad=1) done in VMEM with two row concatenations; width
    # padding is already folded into the banded weight matrices.
    zr = jnp.zeros((1, W * Cin), jnp.float32)
    xp = jnp.concatenate([zr, xin, zr], axis=0)                 # (H+2, W*Cin)

    acc = jnp.zeros((H, W * Cout), jnp.float32)
    for kh in range(3):                                         # 3 large MXU dots
        acc = acc + jnp.dot(
            xp[kh:kh + H, :].astype(MATMUL_DTYPE), w_ref[kh],
            preferred_element_type=jnp.float32)

    # Per-image BN partial sums (per lane; lane = j*Cout + o).  The tiny
    # per-channel reduction over N and the W lane-groups happens in the wrapper.
    s = jnp.sum(acc, axis=0, keepdims=True)                     # (1, W*Cout)
    ss = jnp.sum(acc * acc, axis=0, keepdims=True)              # (1, W*Cout)
    stats_ref[0] = jnp.concatenate([s, ss], axis=0)             # (2, W*Cout)
    y_ref[0] = acc                                              # lane-dense store


def _conv_stats_kernel(x_ref, w_ref, y_ref, stats_ref, *, H, W, Cin, Cout):
    """Block-1 kernel: conv3x3(pad=1) + BN partials on one image."""
    _conv_body(x_ref[0], w_ref, y_ref, stats_ref, H=H, W=W, Cin=Cin, Cout=Cout)


def _bn_relu_conv_stats_kernel(y_prev_ref, scale_ref, shift_ref, w_ref,
                               y_ref, stats_ref, *, H, W, Cin, Cout):
    """Block-2 kernel: fused BN1+ReLU of the previous block, then conv + partials."""
    h = jnp.maximum(y_prev_ref[0] * scale_ref[...] + shift_ref[...], 0.0)
    _conv_body(h, w_ref, y_ref, stats_ref, H=H, W=W, Cin=Cin, Cout=Cout)


def _bn_relu_kernel(y_ref, scale_ref, shift_ref, o_ref):
    """Final BN2 + ReLU (lane-dense elementwise)."""
    o_ref[0] = jnp.maximum(y_ref[0] * scale_ref[...] + shift_ref[...], 0.0)


# --------------------------- pallas_call wrappers ----------------------------
def _conv_pass(x_rows, w_band, *, H, W, Cin, Cout, pre_scale=None, pre_shift=None):
    """One conv block over grid=(N,), optionally fused with the previous BN+ReLU.

    Returns (pre-BN conv output (N, H, W*Cout), BN partials (N, 2, W*Cout)).
    """
    N = x_rows.shape[0]
    out_shape = (
        jax.ShapeDtypeStruct((N, H, W * Cout), jnp.float32),
        jax.ShapeDtypeStruct((N, 2, W * Cout), jnp.float32),
    )
    out_specs = (
        pl.BlockSpec((1, H, W * Cout), lambda n: (n, 0, 0)),
        pl.BlockSpec((1, 2, W * Cout), lambda n: (n, 0, 0)),
    )
    x_spec = pl.BlockSpec((1, H, W * Cin), lambda n: (n, 0, 0))
    w_spec = pl.BlockSpec(w_band.shape, lambda n: (0, 0, 0))    # resident weights

    if pre_scale is None:
        kernel = functools.partial(_conv_stats_kernel, H=H, W=W, Cin=Cin, Cout=Cout)
        in_specs = [x_spec, w_spec]
        args = (x_rows, w_band)
    else:
        kernel = functools.partial(_bn_relu_conv_stats_kernel,
                                   H=H, W=W, Cin=Cin, Cout=Cout)
        vec_spec = pl.BlockSpec((1, W * Cin), lambda n: (0, 0))  # resident vectors
        in_specs = [x_spec, vec_spec, vec_spec, w_spec]
        args = (x_rows, pre_scale, pre_shift, w_band)

    return pl.pallas_call(
        kernel,
        out_shape=out_shape,
        grid=(N,),
        in_specs=in_specs,
        out_specs=out_specs,
        compiler_params=pltpu.CompilerParams(
            dimension_semantics=("parallel",)),
    )(*args)


def _bn_relu_pass(y_rows, scale_l, shift_l):
    """Final BN + ReLU over grid=(N,)."""
    N, H, L = y_rows.shape
    return pl.pallas_call(
        _bn_relu_kernel,
        out_shape=jax.ShapeDtypeStruct((N, H, L), jnp.float32),
        grid=(N,),
        in_specs=[pl.BlockSpec((1, H, L), lambda n: (n, 0, 0)),
                  pl.BlockSpec((1, L), lambda n: (0, 0)),
                  pl.BlockSpec((1, L), lambda n: (0, 0))],
        out_specs=pl.BlockSpec((1, H, L), lambda n: (n, 0, 0)),
        compiler_params=pltpu.CompilerParams(
            dimension_semantics=("parallel",)),
    )(y_rows, scale_l, shift_l)


# --------------------------- parameter preparation ---------------------------
def _banded_conv_weights(w_oihw, W):
    """OIHW (Cout,Cin,3,3) conv weights -> (3, W*Cin, W*Cout) banded matrices.

    With rows packed as W*Cin lanes and outputs as W*Cout lanes, conv3x3(pad=1)
    becomes:  out_row[r, :] = sum_kh x_rows_heightpadded[r+kh, :] @ mats[kh].
    Width padding is folded into the band clipping at the matrix edges.
    """
    Cout, Cin, KH, KW = w_oihw.shape
    eye = jnp.eye(W, dtype=jnp.float32)
    mats = []
    for kh in range(KH):
        m = jnp.zeros((W * Cin, W * Cout), jnp.float32)
        for kw in range(KW):
            band = jnp.kron(eye, w_oihw[:, :, kh, kw].T)        # block-diagonal
            shift = (kw - 1) * Cin                              # shift rows down
            if shift > 0:
                band = jnp.pad(band[:-shift, :], ((shift, 0), (0, 0)))
            elif shift < 0:
                band = jnp.pad(band[-shift:, :], ((0, -shift), (0, 0)))
            m = m + band
        mats.append(m)
    return jnp.stack(mats).astype(MATMUL_DTYPE)


def prepare_params(w1_oihw, g1, b1, w2_oihw, g2, b2, W):
    """One-time (hoisted) conversion of PyTorch-layout parameters to kernel form."""
    return dict(
        w1=_banded_conv_weights(w1_oihw, W),
        w2=_banded_conv_weights(w2_oihw, W),
        g1=g1.astype(jnp.float32), b1=b1.astype(jnp.float32),
        g2=g2.astype(jnp.float32), b2=b2.astype(jnp.float32),
    )


# --------------------------- BN glue (tiny, O(C)) -----------------------------
def _bn_scale_shift(stats, gamma, beta, count, W):
    """Per-channel BN(train) scale/shift from per-image [sum, sumsq] partials,
    broadcast to per-lane (1, W*C) vectors for the lane-packed layout."""
    C = gamma.shape[0]
    s = jnp.sum(stats[:, 0, :].reshape(-1, W, C), axis=(0, 1))    # (C,)
    ss = jnp.sum(stats[:, 1, :].reshape(-1, W, C), axis=(0, 1))   # (C,)
    mean = s / count
    var = jnp.maximum(ss / count - mean * mean, 0.0)   # biased batch variance
    inv = jax.lax.rsqrt(var + EPS)
    scale = gamma * inv
    shift = beta - mean * scale
    return (jnp.tile(scale, W).reshape(1, W * C),
            jnp.tile(shift, W).reshape(1, W * C))


# --------------------------- forward -----------------------------------------
def double_conv2d(x_nchw, params):
    """DoubleConv2d forward. Input/output are NCHW like the PyTorch module."""
    N, Cin, H, W = x_nchw.shape
    C1 = params["g1"].shape[0]
    C2 = params["g2"].shape[0]
    count = N * H * W

    # NCHW -> row-packed channels-last (N, H, W*Cin); hoisted once around the
    # whole double block.
    x_rows = jnp.transpose(x_nchw, (0, 2, 3, 1)).reshape(N, H, W * Cin)
    x_rows = x_rows.astype(jnp.float32)

    # block 1: conv + BN partials
    y1, st1 = _conv_pass(x_rows, params["w1"], H=H, W=W, Cin=Cin, Cout=C1)
    sc1, sh1 = _bn_scale_shift(st1, params["g1"], params["b1"], count, W)

    # block 2: (fused BN1 + ReLU) conv + BN partials
    y2, st2 = _conv_pass(y1, params["w2"], H=H, W=W, Cin=C1, Cout=C2,
                         pre_scale=sc1, pre_shift=sh1)
    sc2, sh2 = _bn_scale_shift(st2, params["g2"], params["b2"], count, W)

    # final BN2 + ReLU
    out_rows = _bn_relu_pass(y2, sc2, sh2)
    return jnp.transpose(out_rows.reshape(N, H, W, C2), (0, 3, 1, 2))


# ---------------- pure-JAX reference for a correctness check -----------------
def _ref_block(x_nchw, w_oihw, gamma, beta):
    y = jax.lax.conv_general_dilated(
        x_nchw, w_oihw, window_strides=(1, 1), padding=((1, 1), (1, 1)),
        dimension_numbers=("NCHW", "OIHW", "NCHW"))
    mean = jnp.mean(y, axis=(0, 2, 3), keepdims=True)
    var = jnp.mean((y - mean) ** 2, axis=(0, 2, 3), keepdims=True)
    y = (y - mean) * jax.lax.rsqrt(var + EPS)
    y = y * gamma.reshape(1, -1, 1, 1) + beta.reshape(1, -1, 1, 1)
    return jnp.maximum(y, 0.0)


def _ref_double_conv(x, w1_oihw, g1, b1, w2_oihw, g2, b2):
    return _ref_block(_ref_block(x, w1_oihw, g1, b1), w2_oihw, g2, b2)


if __name__ == "__main__":
    in_channels, out_channels = 4, 8
    N, H, W = 2, 16, 16

    key = jax.random.PRNGKey(0)
    kx, k1, k2 = jax.random.split(key, 3)

    x = jax.random.normal(kx, (N, in_channels, H, W), dtype=jnp.float32)

    # Conv weights (PyTorch OIHW shapes), deterministic init.
    w1_oihw = 0.1 * jax.random.normal(k1, (out_channels, in_channels, 3, 3), jnp.float32)
    w2_oihw = 0.1 * jax.random.normal(k2, (out_channels, out_channels, 3, 3), jnp.float32)
    # BatchNorm affine params (PyTorch default init).
    g1 = jnp.ones((out_channels,), jnp.float32)
    b1 = jnp.zeros((out_channels,), jnp.float32)
    g2 = jnp.ones((out_channels,), jnp.float32)
    b2 = jnp.zeros((out_channels,), jnp.float32)

    # One-time parameter preparation (hoisted out of the per-call path).
    params = prepare_params(w1_oihw, g1, b1, w2_oihw, g2, b2, W)

    fwd = jax.jit(double_conv2d)
    out = jax.block_until_ready(fwd(x, params))

    ref = _ref_double_conv(x, w1_oihw, g1, b1, w2_oihw, g2, b2)
    # Tolerance reflects bf16 MXU operands (f32 accumulation) vs the f32 reference.
    np.testing.assert_allclose(np.asarray(out), np.asarray(ref), rtol=2e-2, atol=2e-2)

    print("KERNEL_OK")
</pallas_src>

<mosaic_0001>
module attributes {stable_mosaic.version = 11 : i64} {
  func.func @_conv_stats_kernel(%arg0: i32, %arg1: memref<1x16x64xf32, #tpu.memory_space<vmem>>, %arg2: memref<3x64x128xbf16, #tpu.memory_space<vmem>>, %arg3: memref<1x16x128xf32, #tpu.memory_space<vmem>>, %arg4: memref<1x2x128xf32, #tpu.memory_space<vmem>>) attributes {dimension_semantics = [#tpu.dimension_semantics<parallel>], iteration_bounds = array<i64: 2>, scalar_prefetch = 0 : i64, scratch_operands = 0 : i64, tpu.core_type = #tpu.core_type<tc>, window_params = [{transform_indices = @transform_0, window_bounds = array<i64: 1, 16, 64>}, {pipeline_mode = #tpu.pipeline_mode<synchronous>, transform_indices = @transform_1, window_bounds = array<i64: 3, 64, 128>}, {transform_indices = @transform_2, window_bounds = array<i64: 1, 16, 128>}, {transform_indices = @transform_3, window_bounds = array<i64: 1, 2, 128>}]} {
    %c0 = arith.constant 0 : index
    %c0_0 = arith.constant 0 : index
    %c0_1 = arith.constant 0 : index
    %0 = vector.load %arg1[%c0, %c0_0, %c0_1] : memref<1x16x64xf32, #tpu.memory_space<vmem>>, vector<1x16x64xf32>
    %1 = vector.shape_cast %0 : vector<1x16x64xf32> to vector<16x64xf32>
    %cst = arith.constant 0.000000e+00 : f32
    %2 = vector.broadcast %cst : f32 to vector<1x64xf32>
    %3 = tpu.concatenate %2, %1, %2 in 0 : vector<1x64xf32>, vector<16x64xf32>, vector<1x64xf32> -> vector<18x64xf32>
    %cst_2 = arith.constant 0.000000e+00 : f32
    %4 = vector.broadcast %cst_2 : f32 to vector<16x128xf32>
    %5 = vector.extract_strided_slice %3 {offsets = [0, 0], sizes = [16, 64], strides = [1, 1]} : vector<18x64xf32> to vector<16x64xf32>
    %6 = arith.truncf %5 : vector<16x64xf32> to vector<16x64xbf16>
    %c0_3 = arith.constant 0 : index
    %c0_4 = arith.constant 0 : index
    %c0_5 = arith.constant 0 : index
    %7 = vector.load %arg2[%c0_3, %c0_4, %c0_5] : memref<3x64x128xbf16, #tpu.memory_space<vmem>>, vector<1x64x128xbf16>
    %8 = vector.shape_cast %7 : vector<1x64x128xbf16> to vector<64x128xbf16>
    %cst_6 = arith.constant dense<0.000000e+00> : vector<16x128xf32>
    %9 = tpu.matmul %6, %8, %cst_6 {dimension_numbers = #tpu.dot_dimension_numbers<[1], [0], [0], [1], [0, 0, 1, 1], [], []>} : vector<16x64xbf16>, vector<64x128xbf16>, vector<16x128xf32> -> vector<16x128xf32>
    %10 = arith.addf %4, %9 : vector<16x128xf32>
    %11 = vector.extract_strided_slice %3 {offsets = [1, 0], sizes = [16, 64], strides = [1, 1]} : vector<18x64xf32> to vector<16x64xf32>
    %12 = arith.truncf %11 : vector<16x64xf32> to vector<16x64xbf16>
    %c1 = arith.constant 1 : index
    %c0_7 = arith.constant 0 : index
    %c0_8 = arith.constant 0 : index
    %13 = vector.load %arg2[%c1, %c0_7, %c0_8] : memref<3x64x128xbf16, #tpu.memory_space<vmem>>, vector<1x64x128xbf16>
    %14 = vector.shape_cast %13 : vector<1x64x128xbf16> to vector<64x128xbf16>
    %cst_9 = arith.constant dense<0.000000e+00> : vector<16x128xf32>
    %15 = tpu.matmul %12, %14, %cst_9 {dimension_numbers = #tpu.dot_dimension_numbers<[1], [0], [0], [1], [0, 0, 1, 1], [], []>} : vector<16x64xbf16>, vector<64x128xbf16>, vector<16x128xf32> -> vector<16x128xf32>
    %16 = arith.addf %10, %15 : vector<16x128xf32>
    %17 = vector.extract_strided_slice %3 {offsets = [2, 0], sizes = [16, 64], strides = [1, 1]} : vector<18x64xf32> to vector<16x64xf32>
    %18 = arith.truncf %17 : vector<16x64xf32> to vector<16x64xbf16>
    %c2 = arith.constant 2 : index
    %c0_10 = arith.constant 0 : index
    %c0_11 = arith.constant 0 : index
    %19 = vector.load %arg2[%c2, %c0_10, %c0_11] : memref<3x64x128xbf16, #tpu.memory_space<vmem>>, vector<1x64x128xbf16>
    %20 = vector.shape_cast %19 : vector<1x64x128xbf16> to vector<64x128xbf16>
    %cst_12 = arith.constant dense<0.000000e+00> : vector<16x128xf32>
    %21 = tpu.matmul %18, %20, %cst_12 {dimension_numbers = #tpu.dot_dimension_numbers<[1], [0], [0], [1], [0, 0, 1, 1], [], []>} : vector<16x64xbf16>, vector<64x128xbf16>, vector<16x128xf32> -> vector<16x128xf32>
    %22 = arith.addf %16, %21 : vector<16x128xf32>
    %cst_13 = arith.constant dense<0.000000e+00> : vector<128xf32>
    %23 = vector.multi_reduction <add>, %22, %cst_13 [0] : vector<16x128xf32> to vector<128xf32>
    %24 = vector.shape_cast %23 : vector<128xf32> to vector<1x128xf32>
    %25 = arith.mulf %22, %22 : vector<16x128xf32>
    %cst_14 = arith.constant dense<0.000000e+00> : vector<128xf32>
    %26 = vector.multi_reduction <add>, %25, %cst_14 [0] : vector<16x128xf32> to vector<128xf32>
    %27 = vector.shape_cast %26 : vector<128xf32> to vector<1x128xf32>
    %28 = tpu.concatenate %24, %27 in 0 : vector<1x128xf32>, vector<1x128xf32> -> vector<2x128xf32>
    %c0_15 = arith.constant 0 : index
    %c0_16 = arith.constant 0 : index
    %c0_17 = arith.constant 0 : index
    %29 = vector.load %arg4[%c0_15, %c0_16, %c0_17] : memref<1x2x128xf32, #tpu.memory_space<vmem>>, vector<1x2x128xf32>
    %30 = vector.shape_cast %29 : vector<1x2x128xf32> to vector<2x128xf32>
    %31 = vector.shape_cast %28 : vector<2x128xf32> to vector<1x2x128xf32>
    tpu.vector_store %arg4[%c0_15, %c0_16, %c0_17], %31 {strides = array<i32>} : memref<1x2x128xf32, #tpu.memory_space<vmem>>, vector<1x2x128xf32>,
    %c0_18 = arith.constant 0 : index
    %c0_19 = arith.constant 0 : index
    %c0_20 = arith.constant 0 : index
    %32 = vector.load %arg3[%c0_18, %c0_19, %c0_20] : memref<1x16x128xf32, #tpu.memory_space<vmem>>, vector<1x16x128xf32>
    %33 = vector.shape_cast %32 : vector<1x16x128xf32> to vector<16x128xf32>
    %34 = vector.shape_cast %22 : vector<16x128xf32> to vector<1x16x128xf32>
    tpu.vector_store %arg3[%c0_18, %c0_19, %c0_20], %34 {strides = array<i32>} : memref<1x16x128xf32, #tpu.memory_space<vmem>>, vector<1x16x128xf32>,
    return
  }
  func.func @transform_0(%arg0: i32) -> (i32, i32, i32) {
    %c0_i32 = arith.constant 0 : i32
    %c0_i32_0 = arith.constant 0 : i32
    %c0_i32_1 = arith.constant 0 : i32
    return %arg0, %c0_i32, %c0_i32_0 : i32, i32, i32
  }
  func.func @transform_1(%arg0: i32) -> (i32, i32, i32) {
    %c0_i32 = arith.constant 0 : i32
    %c0_i32_0 = arith.constant 0 : i32
    %c0_i32_1 = arith.constant 0 : i32
    %c0_i32_2 = arith.constant 0 : i32
    return %c0_i32, %c0_i32_0, %c0_i32_1 : i32, i32, i32
  }
  func.func @transform_2(%arg0: i32) -> (i32, i32, i32) {
    %c0_i32 = arith.constant 0 : i32
    %c0_i32_0 = arith.constant 0 : i32
    %c0_i32_1 = arith.constant 0 : i32
    return %arg0, %c0_i32, %c0_i32_0 : i32, i32, i32
  }
  func.func @transform_3(%arg0: i32) -> (i32, i32, i32) {
    %c0_i32 = arith.constant 0 : i32
    %c0_i32_0 = arith.constant 0 : i32
    %c0_i32_1 = arith.constant 0 : i32
    return %arg0, %c0_i32, %c0_i32_0 : i32, i32, i32
  }
}

module attributes {stable_mosaic.version = 11 : i64} {
  func.func @_bn_relu_conv_stats_kernel(%arg0: i32, %arg1: memref<1x16x128xf32, #tpu.memory_space<vmem>>, %arg2: memref<1x128xf32, #tpu.memory_space<vmem>>, %arg3: memref<1x128xf32, #tpu.memory_space<vmem>>, %arg4: memref<3x128x128xbf16, #tpu.memory_space<vmem>>, %arg5: memref<1x16x128xf32, #tpu.memory_space<vmem>>, %arg6: memref<1x2x128xf32, #tpu.memory_space<vmem>>) attributes {dimension_semantics = [#tpu.dimension_semantics<parallel>], iteration_bounds = array<i64: 2>, scalar_prefetch = 0 : i64, scratch_operands = 0 : i64, tpu.core_type = #tpu.core_type<tc>, window_params = [{transform_indices = @transform_0, window_bounds = array<i64: 1, 16, 128>}, {pipeline_mode = #tpu.pipeline_mode<synchronous>, transform_indices = @transform_1, window_bounds = array<i64: 1, 128>}, {pipeline_mode = #tpu.pipeline_mode<synchronous>, transform_indices = @transform_2, window_bounds = array<i64: 1, 128>}, {pipeline_mode = #tpu.pipeline_mode<synchronous>, transform_indices = @transform_3, window_bounds = array<i64: 3, 128, 128>}, {transform_indices = @transform_4, window_bounds = array<i64: 1, 16, 128>}, {transform_indices = @transform_5, window_bounds = array<i64: 1, 2, 128>}]} {
    %c0 = arith.constant 0 : index
    %c0_0 = arith.constant 0 : index
    %c0_1 = arith.constant 0 : index
    %0 = vector.load %arg1[%c0, %c0_0, %c0_1] : memref<1x16x128xf32, #tpu.memory_space<vmem>>, vector<1x16x128xf32>
    %1 = vector.shape_cast %0 : vector<1x16x128xf32> to vector<16x128xf32>
    %c0_2 = arith.constant 0 : index
    %c0_3 = arith.constant 0 : index
    %2 = vector.load %arg2[%c0_2, %c0_3] : memref<1x128xf32, #tpu.memory_space<vmem>>, vector<1x128xf32>
    %3 = vector.broadcast %2 : vector<1x128xf32> to vector<16x128xf32>
    %4 = arith.mulf %1, %3 : vector<16x128xf32>
    %c0_4 = arith.constant 0 : index
    %c0_5 = arith.constant 0 : index
    %5 = vector.load %arg3[%c0_4, %c0_5] : memref<1x128xf32, #tpu.memory_space<vmem>>, vector<1x128xf32>
    %6 = vector.broadcast %5 : vector<1x128xf32> to vector<16x128xf32>
    %7 = arith.addf %4, %6 : vector<16x128xf32>
    %cst = arith.constant 0.000000e+00 : f32
    %8 = vector.broadcast %cst : f32 to vector<16x128xf32>
    %9 = arith.maximumf %7, %8 : vector<16x128xf32>
    %cst_6 = arith.constant 0.000000e+00 : f32
    %10 = vector.broadcast %cst_6 : f32 to vector<1x128xf32>
    %11 = tpu.concatenate %10, %9, %10 in 0 : vector<1x128xf32>, vector<16x128xf32>, vector<1x128xf32> -> vector<18x128xf32>
    %cst_7 = arith.constant 0.000000e+00 : f32
    %12 = vector.broadcast %cst_7 : f32 to vector<16x128xf32>
    %13 = vector.extract_strided_slice %11 {offsets = [0, 0], sizes = [16, 128], strides = [1, 1]} : vector<18x128xf32> to vector<16x128xf32>
    %14 = arith.truncf %13 : vector<16x128xf32> to vector<16x128xbf16>
    %c0_8 = arith.constant 0 : index
    %c0_9 = arith.constant 0 : index
    %c0_10 = arith.constant 0 : index
    %15 = vector.load %arg4[%c0_8, %c0_9, %c0_10] : memref<3x128x128xbf16, #tpu.memory_space<vmem>>, vector<1x128x128xbf16>
    %16 = vector.shape_cast %15 : vector<1x128x128xbf16> to vector<128x128xbf16>
    %cst_11 = arith.constant dense<0.000000e+00> : vector<16x128xf32>
    %17 = tpu.matmul %14, %16, %cst_11 {dimension_numbers = #tpu.dot_dimension_numbers<[1], [0], [0], [1], [0, 0, 1, 1], [], []>} : vector<16x128xbf16>, vector<128x128xbf16>, vector<16x128xf32> -> vector<16x128xf32>
    %18 = arith.addf %12, %17 : vector<16x128xf32>
    %19 = vector.extract_strided_slice %11 {offsets = [1, 0], sizes = [16, 128], strides = [1, 1]} : vector<18x128xf32> to vector<16x128xf32>
    %20 = arith.truncf %19 : vector<16x128xf32> to vector<16x128xbf16>
    %c1 = arith.constant 1 : index
    %c0_12 = arith.constant 0 : index
    %c0_13 = arith.constant 0 : index
    %21 = vector.load %arg4[%c1, %c0_12, %c0_13] : memref<3x128x128xbf16, #tpu.memory_space<vmem>>, vector<1x128x128xbf16>
    %22 = vector.shape_cast %21 : vector<1x128x128xbf16> to vector<128x128xbf16>
    %cst_14 = arith.constant dense<0.000000e+00> : vector<16x128xf32>
    %23 = tpu.matmul %20, %22, %cst_14 {dimension_numbers = #tpu.dot_dimension_numbers<[1], [0], [0], [1], [0, 0, 1, 1], [], []>} : vector<16x128xbf16>, vector<128x128xbf16>, vector<16x128xf32> -> vector<16x128xf32>
    %24 = arith.addf %18, %23 : vector<16x128xf32>
    %25 = vector.extract_strided_slice %11 {offsets = [2, 0], sizes = [16, 128], strides = [1, 1]} : vector<18x128xf32> to vector<16x128xf32>
    %26 = arith.truncf %25 : vector<16x128xf32> to vector<16x128xbf16>
    %c2 = arith.constant 2 : index
    %c0_15 = arith.constant 0 : index
    %c0_16 = arith.constant 0 : index
    %27 = vector.load %arg4[%c2, %c0_15, %c0_16] : memref<3x128x128xbf16, #tpu.memory_space<vmem>>, vector<1x128x128xbf16>
    %28 = vector.shape_cast %27 : vector<1x128x128xbf16> to vector<128x128xbf16>
    %cst_17 = arith.constant dense<0.000000e+00> : vector<16x128xf32>
    %29 = tpu.matmul %26, %28, %cst_17 {dimension_numbers = #tpu.dot_dimension_numbers<[1], [0], [0], [1], [0, 0, 1, 1], [], []>} : vector<16x128xbf16>, vector<128x128xbf16>, vector<16x128xf32> -> vector<16x128xf32>
    %30 = arith.addf %24, %29 : vector<16x128xf32>
    %cst_18 = arith.constant dense<0.000000e+00> : vector<128xf32>
    %31 = vector.multi_reduction <add>, %30, %cst_18 [0] : vector<16x128xf32> to vector<128xf32>
    %32 = vector.shape_cast %31 : vector<128xf32> to vector<1x128xf32>
    %33 = arith.mulf %30, %30 : vector<16x128xf32>
    %cst_19 = arith.constant dense<0.000000e+00> : vector<128xf32>
    %34 = vector.multi_reduction <add>, %33, %cst_19 [0] : vector<16x128xf32> to vector<128xf32>
    %35 = vector.shape_cast %34 : vector<128xf32> to vector<1x128xf32>
    %36 = tpu.concatenate %32, %35 in 0 : vector<1x128xf32>, vector<1x128xf32> -> vector<2x128xf32>
    %c0_20 = arith.constant 0 : index
    %c0_21 = arith.constant 0 : index
    %c0_22 = arith.constant 0 : index
    %37 = vector.load %arg6[%c0_20, %c0_21, %c0_22] : memref<1x2x128xf32, #tpu.memory_space<vmem>>, vector<1x2x128xf32>
    %38 = vector.shape_cast %37 : vector<1x2x128xf32> to vector<2x128xf32>
    %39 = vector.shape_cast %36 : vector<2x128xf32> to vector<1x2x128xf32>
    tpu.vector_store %arg6[%c0_20, %c0_21, %c0_22], %39 {strides = array<i32>} : memref<1x2x128xf32, #tpu.memory_space<vmem>>, vector<1x2x128xf32>,
    %c0_23 = arith.constant 0 : index
    %c0_24 = arith.constant 0 : index
    %c0_25 = arith.constant 0 : index
    %40 = vector.load %arg5[%c0_23, %c0_24, %c0_25] : memref<1x16x128xf32, #tpu.memory_space<vmem>>, vector<1x16x128xf32>
    %41 = vector.shape_cast %40 : vector<1x16x128xf32> to vector<16x128xf32>
    %42 = vector.shape_cast %30 : vector<16x128xf32> to vector<1x16x128xf32>
    tpu.vector_store %arg5[%c0_23, %c0_24, %c0_25], %42 {strides = array<i32>} : memref<1x16x128xf32, #tpu.memory_space<vmem>>, vector<1x16x128xf32>,
    return
  }
  func.func @transform_0(%arg0: i32) -> (i32, i32, i32) {
    %c0_i32 = arith.constant 0 : i32
    %c0_i32_0 = arith.constant 0 : i32
    %c0_i32_1 = arith.constant 0 : i32
    return %arg0, %c0_i32, %c0_i32_0 : i32, i32, i32
  }
  func.func @transform_1(%arg0: i32) -> (i32, i32) {
    %c0_i32 = arith.constant 0 : i32
    %c0_i32_0 = arith.constant 0 : i32
    %c0_i32_1 = arith.constant 0 : i32
    return %c0_i32, %c0_i32_0 : i32, i32
  }
  func.func @transform_2(%arg0: i32) -> (i32, i32) {
    %c0_i32 = arith.constant 0 : i32
    %c0_i32_0 = arith.constant 0 : i32
    %c0_i32_1 = arith.constant 0 : i32
    return %c0_i32, %c0_i32_0 : i32, i32
  }
  func.func @transform_3(%arg0: i32) -> (i32, i32, i32) {
    %c0_i32 = arith.constant 0 : i32
    %c0_i32_0 = arith.constant 0 : i32
    %c0_i32_1 = arith.constant 0 : i32
    %c0_i32_2 = arith.constant 0 : i32
    return %c0_i32, %c0_i32_0, %c0_i32_1 : i32, i32, i32
  }
  func.func @transform_4(%arg0: i32) -> (i32, i32, i32) {
    %c0_i32 = arith.constant 0 : i32
    %c0_i32_0 = arith.constant 0 : i32
    %c0_i32_1 = arith.constant 0 : i32
    return %arg0, %c0_i32, %c0_i32_0 : i32, i32, i32
  }
  func.func @transform_5(%arg0: i32) -> (i32, i32, i32) {
    %c0_i32 = arith.constant 0 : i32
    %c0_i32_0 = arith.constant 0 : i32
    %c0_i32_1 = arith.constant 0 : i32
    return %arg0, %c0_i32, %c0_i32_0 : i32, i32, i32
  }
}

module attributes {stable_mosaic.version = 11 : i64} {
  func.func @_bn_relu_kernel(%arg0: i32, %arg1: memref<1x16x128xf32, #tpu.memory_space<vmem>>, %arg2: memref<1x128xf32, #tpu.memory_space<vmem>>, %arg3: memref<1x128xf32, #tpu.memory_space<vmem>>, %arg4: memref<1x16x128xf32, #tpu.memory_space<vmem>>) attributes {dimension_semantics = [#tpu.dimension_semantics<parallel>], iteration_bounds = array<i64: 2>, scalar_prefetch = 0 : i64, scratch_operands = 0 : i64, tpu.core_type = #tpu.core_type<tc>, window_params = [{transform_indices = @transform_0, window_bounds = array<i64: 1, 16, 128>}, {pipeline_mode = #tpu.pipeline_mode<synchronous>, transform_indices = @transform_1, window_bounds = array<i64: 1, 128>}, {pipeline_mode = #tpu.pipeline_mode<synchronous>, transform_indices = @transform_2, window_bounds = array<i64: 1, 128>}, {transform_indices = @transform_3, window_bounds = array<i64: 1, 16, 128>}]} {
    %c0 = arith.constant 0 : index
    %c0_0 = arith.constant 0 : index
    %c0_1 = arith.constant 0 : index
    %0 = vector.load %arg1[%c0, %c0_0, %c0_1] : memref<1x16x128xf32, #tpu.memory_space<vmem>>, vector<1x16x128xf32>
    %1 = vector.shape_cast %0 : vector<1x16x128xf32> to vector<16x128xf32>
    %c0_2 = arith.constant 0 : index
    %c0_3 = arith.constant 0 : index
    %2 = vector.load %arg2[%c0_2, %c0_3] : memref<1x128xf32, #tpu.memory_space<vmem>>, vector<1x128xf32>
    %3 = vector.broadcast %2 : vector<1x128xf32> to vector<16x128xf32>
    %4 = arith.mulf %1, %3 : vector<16x128xf32>
    %c0_4 = arith.constant 0 : index
    %c0_5 = arith.constant 0 : index
    %5 = vector.load %arg3[%c0_4, %c0_5] : memref<1x128xf32, #tpu.memory_space<vmem>>, vector<1x128xf32>
    %6 = vector.broadcast %5 : vector<1x128xf32> to vector<16x128xf32>
    %7 = arith.addf %4, %6 : vector<16x128xf32>
    %cst = arith.constant 0.000000e+00 : f32
    %8 = vector.broadcast %cst : f32 to vector<16x128xf32>
    %9 = arith.maximumf %7, %8 : vector<16x128xf32>
    %c0_6 = arith.constant 0 : index
    %c0_7 = arith.constant 0 : index
    %c0_8 = arith.constant 0 : index
    %10 = vector.load %arg4[%c0_6, %c0_7, %c0_8] : memref<1x16x128xf32, #tpu.memory_space<vmem>>, vector<1x16x128xf32>
    %11 = vector.shape_cast %10 : vector<1x16x128xf32> to vector<16x128xf32>
    %12 = vector.shape_cast %9 : vector<16x128xf32> to vector<1x16x128xf32>
    tpu.vector_store %arg4[%c0_6, %c0_7, %c0_8], %12 {strides = array<i32>} : memref<1x16x128xf32, #tpu.memory_space<vmem>>, vector<1x16x128xf32>,
    return
  }
  func.func @transform_0(%arg0: i32) -> (i32, i32, i32) {
    %c0_i32 = arith.constant 0 : i32
    %c0_i32_0 = arith.constant 0 : i32
    %c0_i32_1 = arith.constant 0 : i32
    return %arg0, %c0_i32, %c0_i32_0 : i32, i32, i32
  }
  func.func @transform_1(%arg0: i32) -> (i32, i32) {
    %c0_i32 = arith.constant 0 : i32
    %c0_i32_0 = arith.constant 0 : i32
    %c0_i32_1 = arith.constant 0 : i32
    return %c0_i32, %c0_i32_0 : i32, i32
  }
  func.func @transform_2(%arg0: i32) -> (i32, i32) {
    %c0_i32 = arith.constant 0 : i32
    %c0_i32_0 = arith.constant 0 : i32
    %c0_i32_1 = arith.constant 0 : i32
    return %c0_i32, %c0_i32_0 : i32, i32
  }
  func.func @transform_3(%arg0: i32) -> (i32, i32, i32) {
    %c0_i32 = arith.constant 0 : i32
    %c0_i32_0 = arith.constant 0 : i32
    %c0_i32_1 = arith.constant 0 : i32
    return %arg0, %c0_i32, %c0_i32_0 : i32, i32, i32
  }
}

</mosaic_0001>

<llo_original>
// kernel: tile.28
$region0: #{tile.28}
  #allocation0 [shape = 's32[1]{0}', space=sflag, size = 0x4, scoped, tag = 'scoped memory for tile.28']
  %s0 = inlined_call_operand.vmem [shape: f32[8], index: 0, kind: input, shape index: {}]
  %s1 = inlined_call_operand.vmem [shape: f32[16,8], index: 1, kind: output, shape index: {}]
  // Predicated region
  $region2: #{tile.28} parent=0 // pred_check
    _
  $region3: #{tile.28} parent=0 // pred_check_branch
    %3 = sbr.rel (0) target = $region5
  $region4: #{tile.28} parent=0 // pred_region
    _
  $region5: #{tile.28} parent=0 // pred_fallthru
    _
  %v4 = vld [vmem:[%s0] ss:$0 sm:$0xff]
  %5 = vst [vmem:[%s1] sm:$0xff] %v4
  %s6 = scalar_lea.vmem %s1, 8
  %7 = vst [vmem:[%s6] sm:$0xff] %v4

// kernel: tile.29
$region0: #{tile.29}
  %s0 = inlined_call_operand.vmem [shape: f32[16,8], index: 0, kind: input, shape index: {}]
  %s1 = inlined_call_operand.vmem [shape: f32[1,128], index: 1, kind: output, shape index: {}]
  $region1: #{tile.29} parent=0
    #allocation0 [shape = 'u8[4096]{0}', space=vmem, size = 0x1000, scoped, tag = 'scoped mem for output reshape']
    %v2 = vld [vmem:[%s0] sm:$0x1]
    %vm3 = vcmask 64512
    %4 = vst.msk [vmem:[#allocation0] sm:$0x1] %vm3, %v2
    %s5 = scalar_lea.vmem %s0, 15
    %v6 = vld [vmem:[%s5] sm:$0x1]
    %7 = vrot.lane.b32.xlu0 %v6, 120
    %v8 = vpop.permute.xlu0 %7
    %vm9 = vcmask 1048512
    %10 = vst.msk [vmem:[#allocation0] sm:$0x1] %vm9, %v8
    %s11 = scalar_lea.vmem %s0, 14
    %v12 = vld [vmem:[%s11] sm:$0x1]
    %13 = vrot.lane.b32.xlu0 %v12, 112
    %v14 = vpop.permute.xlu0 %13
    %vm15 = vcmask 982912
    %16 = vst.msk [vmem:[#allocation0] sm:$0x1] %vm15, %v14
    %s17 = scalar_lea.vmem %s0, 13
    %v18 = vld [vmem:[%s17] sm:$0x1]
    %19 = vrot.lane.b32.xlu0 %v18, 104
    %v20 = vpop.permute.xlu0 %19
    %vm21 = vcmask 917312
    %22 = vst.msk [vmem:[#allocation0] sm:$0x1] %vm21, %v20
    %s23 = scalar_lea.vmem %s0, 12
    %v24 = vld [vmem:[%s23] sm:$0x1]
    %25 = vrot.lane.b32.xlu0 %v24, 96
    %v26 = vpop.permute.xlu0 %25
    %vm27 = vcmask 851712
    %28 = vst.msk [vmem:[#allocation0] sm:$0x1] %vm27, %v26
    %s29 = scalar_lea.vmem %s0, 11
    %v30 = vld [vmem:[%s29] sm:$0x1]
    %31 = vrot.lane.b32.xlu0 %v30, 88
    %v32 = vpop.permute.xlu0 %31
    %vm33 = vcmask 786112
    %34 = vst.msk [vmem:[#allocation0] sm:$0x1] %vm33, %v32
    %s35 = scalar_lea.vmem %s0, 10
    %v36 = vld [vmem:[%s35] sm:$0x1]
    %37 = vrot.lane.b32.xlu0 %v36, 80
    %v38 = vpop.permute.xlu0 %37
    %vm39 = vcmask 720512
    %40 = vst.msk [vmem:[#allocation0] sm:$0x1] %vm39, %v38
    %s41 = scalar_lea.vmem %s0, 9
    %v42 = vld [vmem:[%s41] sm:$0x1]
    %43 = vrot.lane.b32.xlu0 %v42, 72
    %v44 = vpop.permute.xlu0 %43
    %vm45 = vcmask 654912
    %46 = vst.msk [vmem:[#allocation0] sm:$0x1] %vm45, %v44
    %s47 = scalar_lea.vmem %s0, 8
    %v48 = vld [vmem:[%s47] sm:$0x1]
    %49 = vrot.lane.b32.xlu0 %v48, 64
    %v50 = vpop.permute.xlu0 %49
    %vm51 = vcmask 589312
    %52 = vst.msk [vmem:[#allocation0] sm:$0x1] %vm51, %v50
    %s53 = scalar_lea.vmem %s0, 7
    %v54 = vld [vmem:[%s53] sm:$0x1]
    %55 = vrot.lane.b32.xlu0 %v54, 56
    %v56 = vpop.permute.xlu0 %55
    %vm57 = vcmask 523712
    %58 = vst.msk [vmem:[#allocation0] sm:$0x1] %vm57, %v56
    %s59 = scalar_lea.vmem %s0, 6
    %v60 = vld [vmem:[%s59] sm:$0x1]
    %61 = vrot.lane.b32.xlu0 %v60, 48
    %v62 = vpop.permute.xlu0 %61
    %vm63 = vcmask 458112
    %64 = vst.msk [vmem:[#allocation0] sm:$0x1] %vm63, %v62
    %s65 = scalar_lea.vmem %s0, 5
    %v66 = vld [vmem:[%s65] sm:$0x1]
    %67 = vrot.lane.b32.xlu0 %v66, 40
    %v68 = vpop.permute.xlu0 %67
    %vm69 = vcmask 392512
    %70 = vst.msk [vmem:[#allocation0] sm:$0x1] %vm69, %v68
    %s71 = scalar_lea.vmem %s0, 4
    %v72 = vld [vmem:[%s71] sm:$0x1]
    %73 = vrot.lane.b32.xlu0 %v72, 32
    %v74 = vpop.permute.xlu0 %73
    %vm75 = vcmask 326912
    %76 = vst.msk [vmem:[#allocation0] sm:$0x1] %vm75, %v74
    %s77 = scalar_lea.vmem %s0, 3
    %v78 = vld [vmem:[%s77] sm:$0x1]
    %79 = vrot.lane.b32.xlu0 %v78, 24
    %v80 = vpop.permute.xlu0 %79
    %vm81 = vcmask 261312
    %82 = vst.msk [vmem:[#allocation0] sm:$0x1] %vm81, %v80
    %s83 = scalar_lea.vmem %s0, 2
    %v84 = vld [vmem:[%s83] sm:$0x1]
    %85 = vrot.lane.b32.xlu0 %v84, 16
    %v86 = vpop.permute.xlu0 %85
    %vm87 = vcmask 195712
    %88 = vst.msk [vmem:[#allocation0] sm:$0x1] %vm87, %v86
    %s89 = scalar_lea.vmem %s0, 1
    %v90 = vld [vmem:[%s89] sm:$0x1]
    %91 = vrot.lane.b32.xlu0 %v90, 8
    %v92 = vpop.permute.xlu0 %91
    %vm93 = vcmask 130112
    %94 = vst.msk [vmem:[#allocation0] sm:$0x1] %vm93, %v92
    %s96 = sshll.u32 1, 1
    %s97 = ssub.s32 %s96, 1
    %v99 = vld [vmem:[#allocation0] sm:%s97]
    %s100 = sshll.u32 1, 1
    %s101 = ssub.s32 %s100, 1
    %102 = vst [vmem:[%s1] sm:%s101] %v99

// kernel: double_conv2d.3
$region0: #{double_conv2d.3}
  #allocation0 [shape = 'u32[]', space=smem, size = 0x4, offset = 0x4, fixed_abs, tag = 'smem constant byte address 0x4 - core index']
  #allocation1 [shape = 'u32[144,128]{1,0:T(1,128)}', space=vmem, size = 0x12000, scoped, tag = 'internal scratch']
  %s0 = inlined_call_operand.vmem [shape: f32[2,16,64], index: 0, kind: input, shape index: {}]
  %s1 = inlined_call_operand.vmem [shape: bf16[3,64,128], index: 1, kind: input, shape index: {}]
  %s2 = inlined_call_operand.vmem [shape: f32[2,16,128], index: 2, kind: output, shape index: {0}]
  %s3 = inlined_call_operand.vmem [shape: f32[2,2,128], index: 3, kind: output, shape index: {1}]
  %4 = xla_tuple %s2, %s3
  %s5 = sld [smem:[#allocation0]]
  $region49: #{double_conv2d.3} parent=0
    _
  %s7 = ssub.s32 1, %s5
  %s8 = scalar_select 0, %s7, %s5
  loop: start=0, step=1, limit=4
  $region2: #{double_conv2d.3} parent=0 // loop_pre_header
    _
  $region3: #{double_conv2d.3} parent=0 // loop_header
    %s10 = sphi 0, %s14
    %p11 = scmp.ge.s32.totalorder %s10, 4
    %s20 = sphi 0, %s22
    %s23 = sphi 0, %s20
    %s24 = sphi 0, %s23
    %s40 = sphi 0, %s24
    %s44 = sphi 0, %s44
    %s46 = sphi 0, %s44
    %s47 = sphi 0, %s46
    %s61 = sphi 0, %s47
    %s67 = sphi 0, %s69
    %s70 = sphi 0, %s67
    %s71 = sphi 0, %s70
    %s87 = sphi 0, %s71
    %s93 = sphi 0, %s95
    %s96 = sphi 0, %s93
    %s97 = sphi 0, %s96
    %s113 = sphi 0, %s97
  $region4: #{double_conv2d.3} parent=0 // loop_header_branch
    %13 = sbr.rel (%p11) target = $region8
  $region5: #{double_conv2d.3} parent=0 // loop_body
    %s15 = ssub.s32 %s10, 1
    %s16 = ssub.s32 %s10, 2
    %s17 = sadd.s32 %s10, 1
    %s18 = ssub.s32 %s10, %s17
    %p19 = scmp.eq.s32.totalorder %s18, 0
    %s21 = sadd.s32 %s20, 1
    %s22 = scalar_select %p19, %s20, %s21
    %p25 = pneg %p19
    %p26 = scmp.eq.s32.totalorder %s10, 1
    %p27 = por %p25, %p26
    %p28 = scmp.ne.s32.totalorder %s20, %s23
    %p29 = scmp.eq.s32.totalorder %s10, 0
    %p30 = por %p28, %p29
    %p31 = scmp.ne.s32.totalorder %s20, %s23
    %p32 = scmp.eq.s32.totalorder %s15, 1
    %p33 = por %p31, %p32
    %p34 = scmp.ne.s32.totalorder %s23, %s24
    %p35 = scmp.eq.s32.totalorder %s15, 0
    %p36 = por %p34, %p35
    %p37 = scmp.ne.s32.totalorder %s23, %s24
    %p38 = scmp.eq.s32.totalorder %s16, 1
    %p39 = por %p37, %p38
    %p41 = scmp.ne.s32.totalorder %s24, %s40
    %p42 = scmp.eq.s32.totalorder %s16, 0
    %p43 = por %p41, %p42
    %s45 = sadd.s32 %s44, 1
    %p48 = scmp.eq.s32.totalorder %s10, 1
    %p49 = scmp.ne.s32.totalorder %s44, %s46
    %p50 = scmp.eq.s32.totalorder %s10, 0
    %p51 = por %p49, %p50
    %p52 = scmp.ne.s32.totalorder %s44, %s46
    %p53 = scmp.eq.s32.totalorder %s15, 1
    %p54 = por %p52, %p53
    %p55 = scmp.ne.s32.totalorder %s46, %s47
    %p56 = scmp.eq.s32.totalorder %s15, 0
    %p57 = por %p55, %p56
    %p58 = scmp.ne.s32.totalorder %s46, %s47
    %p59 = scmp.eq.s32.totalorder %s16, 1
    %p60 = por %p58, %p59
    %p62 = scmp.ne.s32.totalorder %s47, %s61
    %p63 = scmp.eq.s32.totalorder %s16, 0
    %p64 = por %p62, %p63
    %s65 = ssub.s32 %s10, %s17
    %p66 = scmp.eq.s32.totalorder %s65, 0
    %s68 = sadd.s32 %s67, 1
    %s69 = scalar_select %p66, %s67, %s68
    %p72 = pneg %p66
    %p73 = scmp.eq.s32.totalorder %s10, 1
    %p74 = por %p72, %p73
    %p75 = scmp.ne.s32.totalorder %s67, %s70
    %p76 = scmp.eq.s32.totalorder %s10, 0
    %p77 = por %p75, %p76
    %p78 = scmp.ne.s32.totalorder %s67, %s70
    %p79 = scmp.eq.s32.totalorder %s15, 1
    %p80 = por %p78, %p79
    %p81 = scmp.ne.s32.totalorder %s70, %s71
    %p82 = scmp.eq.s32.totalorder %s15, 0
    %p83 = por %p81, %p82
    %p84 = scmp.ne.s32.totalorder %s70, %s71
    %p85 = scmp.eq.s32.totalorder %s16, 1
    %p86 = por %p84, %p85
    %p88 = scmp.ne.s32.totalorder %s71, %s87
    %p89 = scmp.eq.s32.totalorder %s16, 0
    %p90 = por %p88, %p89
    %s91 = ssub.s32 %s10, %s17
    %p92 = scmp.eq.s32.totalorder %s91, 0
    %s94 = sadd.s32 %s93, 1
    %s95 = scalar_select %p92, %s93, %s94
    %p98 = pneg %p92
    %p99 = scmp.eq.s32.totalorder %s10, 1
    %p100 = por %p98, %p99
    %p101 = scmp.ne.s32.totalorder %s93, %s96
    %p102 = scmp.eq.s32.totalorder %s10, 0
    %p103 = por %p101, %p102
    %p104 = scmp.ne.s32.totalorder %s93, %s96
    %p105 = scmp.eq.s32.totalorder %s15, 1
    %p106 = por %p104, %p105
    %p107 = scmp.ne.s32.totalorder %s96, %s97
    %p108 = scmp.eq.s32.totalorder %s15, 0
    %p109 = por %p107, %p108
    %p110 = scmp.ne.s32.totalorder %s96, %s97
    %p111 = scmp.eq.s32.totalorder %s16, 1
    %p112 = por %p110, %p111
    %p114 = scmp.ne.s32.totalorder %s97, %s113
    %p115 = scmp.eq.s32.totalorder %s16, 0
    %p116 = por %p114, %p115
    %p117 = scmp.le.s32.totalorder 1, %s10
    %p118 = scmp.lt.s32.totalorder %s10, 3
    %p119 = pnand %p117, %p118
    %p120 = pneg %p119
    // Predicated region
    $region9: #{double_conv2d.3} parent=5 // pred_check
      _
    $region10: #{double_conv2d.3} parent=5 // pred_check_branch
      %122 = sbr.rel (%p119) target = $region12
    $region11: #{double_conv2d.3} parent=5 // pred_region
      %s123 = ssub.s32 %s10, 1
      // Predicated region
      $region13: #{double_conv2d.3} parent=11 // pred_check
        %p124 = pneg %p57
      $region14: #{double_conv2d.3} parent=11 // pred_check_branch
        %126 = sbr.rel (%p124) target = $region16
      $region15: #{double_conv2d.3} parent=11 // pred_region
        _
      $region16: #{double_conv2d.3} parent=11 // pred_fallthru
        _
    $region12: #{double_conv2d.3} parent=5 // pred_fallthru
      _
    %p127 = scmp.lt.s32.totalorder %s10, 2
    // Predicated region
    $region17: #{double_conv2d.3} parent=5 // pred_check
      %p128 = pneg %p127
    $region18: #{double_conv2d.3} parent=5 // pred_check_branch
      %130 = sbr.rel (%p128) target = $region20
    $region19: #{double_conv2d.3} parent=5 // pred_region
      // Predicated region
      $region21: #{double_conv2d.3} parent=19 // pred_check
        %p131 = pneg %p30
      $region22: #{double_conv2d.3} parent=19 // pred_check_branch
        %133 = sbr.rel (%p131) target = $region24
      $region23: #{double_conv2d.3} parent=19 // pred_region
        %p134 = scmp.lt.s32.totalorder %s10, 1
        %s135 = scalar_select %p134, %s10, 1
        %s136 = smul.addr %s135, 2
        %s137 = smul.addr %s136, 8
        %s138 = scalar_lea.vmem %s0, %s137
      $region24: #{double_conv2d.3} parent=19 // pred_fallthru
        _
    $region20: #{double_conv2d.3} parent=5 // pred_fallthru
      _
    %p139 = scmp.le.s32.totalorder 1, %s10
    %p140 = scmp.lt.s32.totalorder %s10, 3
    %p141 = pnand %p139, %p140
    %p142 = pneg %p141
    // Predicated region
    $region25: #{double_conv2d.3} parent=5 // pred_check
      _
    $region26: #{double_conv2d.3} parent=5 // pred_check_branch
      %144 = sbr.rel (%p141) target = $region28
    $region27: #{double_conv2d.3} parent=5 // pred_region
      %s145 = ssub.s32 %s10, 1
      %p146 = scmp.lt.s32.totalorder %s15, 1
      %s147 = scalar_select %p146, %s15, 1
      %s148 = smul.addr %s147, 2
      %s149 = smul.addr %s148, 8
      %s150 = scalar_lea.vmem %s0, %s149
      %p151 = pneg %p36
      %p152 = pneg %p33
      %p153 = pneg %p57
      %p154 = pneg %p54
      %p155 = pneg %p83
      %p156 = pneg %p80
      %p157 = scmp.lt.s32.totalorder %s15, 1
      %s158 = scalar_select %p157, %s15, 1
      %s159 = smul.addr %s158, 2
      %s160 = smul.addr %s159, 8
      %s161 = scalar_lea.vmem %s2, %s160
      %p162 = pneg %p109
      %p163 = pneg %p106
      %p164 = scmp.lt.s32.totalorder %s15, 1
      %s165 = scalar_select %p164, %s15, 1
      %s166 = smul.addr %s165, 2
      %s167 = scalar_lea.vmem %s3, %s166
      %p168 = scmp.lt.s32.totalorder %s15, 1
      %s169 = scalar_select %p168, %s15, 1
      %s170 = smul.addr %s169, 2
      %s171 = smul.addr %s170, 8
      %s172 = scalar_lea.vmem %s0, %s171
      %p173 = scmp.lt.s32.totalorder %s15, 1
      %s174 = scalar_select %p173, %s15, 1
      %s175 = smul.addr %s174, 2
      %s176 = smul.addr %s175, 8
      %s177 = scalar_lea.vmem %s2, %s176
      %p178 = scmp.lt.s32.totalorder %s15, 1
      %s179 = scalar_select %p178, %s15, 1
      %s180 = smul.addr %s179, 2
      %s181 = scalar_lea.vmem %s3, %s180
      %v183 = vld [vmem:[%s172] sm:$0xff]
      %v184 = vld [vmem:[%s172 + $0x8] sm:$0xff]
      %vm187 = vcmask 1040384
      %v188 = vrot.slane %v183, 7
      %v189 = vrot.slane %v184, 7
      %v190 = vsel %vm187, %v188, %v189
      %v194 = vsel %vm187, 0.0, %v188
      %v195 = vsel %vm187, %v189, 0.0
      %v196 = vpack.c.bf16 %v190, %v194
      %v197 = vld [vmem:[%s1] sm:$0xf]
      %v198 = vld [vmem:[%s1 + $0x4] sm:$0xf]
      %v199 = vld [vmem:[%s1 + $0x8] sm:$0xf]
      %v200 = vld [vmem:[%s1 + $0xc] sm:$0xf]
      %v201 = vld [vmem:[%s1 + $0x10] sm:$0xf]
      %v202 = vld [vmem:[%s1 + $0x14] sm:$0xf]
      %v203 = vld [vmem:[%s1 + $0x18] sm:$0xf]
      %v204 = vld [vmem:[%s1 + $0x1c] sm:$0xf]
      %v205 = vpack.c.bf16 %v195, %v195
      %s206 = scalar_lea.vmem %s1, 32
      %v207 = vld [vmem:[%s206] sm:$0xf]
      %v208 = vld [vmem:[%s206 + $0x4] sm:$0xf]
      %v209 = vld [vmem:[%s206 + $0x8] sm:$0xf]
      %v210 = vld [vmem:[%s206 + $0xc] sm:$0xf]
      %v211 = vld [vmem:[%s206 + $0x10] sm:$0xf]
      %v212 = vld [vmem:[%s206 + $0x14] sm:$0xf]
      %v213 = vld [vmem:[%s206 + $0x18] sm:$0xf]
      %v214 = vld [vmem:[%s206 + $0x1c] sm:$0xf]
      %vm215 = vsmask.f32 7424
      %v217 = vshrl.u32 %v196, 16
      %v219 = vshll.u32 %v196, 16
      %v221 = vrot.slane %v219, 1
      %v222 = vor.u32 %v217, %v221
      %v224 = vshll.u32 %v205, 16
      %v226 = vrot.slane %v224, 1
      %v227 = vsel %vm215, %v222, %v226
      %v236 = vunpack.c.l.b16 %v207
      %v237 = vunpack.c.l.b16 %v208
      %v238 = vunpack.c.l.b16 %v209
      %v239 = vunpack.c.l.b16 %v210
      %v240 = vunpack.c.l.b16 %v211
      %v241 = vunpack.c.l.b16 %v212
      %v242 = vunpack.c.l.b16 %v213
      %v243 = vunpack.c.l.b16 %v214
      %v244 = vpack.c.b16 %v237, %v236
      %v245 = vpack.c.b16 %v239, %v238
      %v246 = vpack.c.b16 %v241, %v240
      %v247 = vpack.c.b16 %v243, %v242
      %vm252 = vcmask 523264
      %v254 = vsel %vm252, %v227, 0
      %256 = vmatprep.subr.bf16.mxu0 0
      %257 = vmatpush1.bf16.msra.mxu0 0
      %258 = vmatprep.subr.bf16.mxu0 0
      %259 = vmatpush1.bf16.msra.mxu0 0
      %260 = vmatprep.subr.bf16.mxu0 0
      %261 = vmatpush1.bf16.msra.mxu0 0
      %262 = vmatprep.subr.bf16.mxu0 0
      %263 = vmatpush1.bf16.msra.mxu0 0
      %264 = vmatprep.subr.bf16.mxu0 0
      %265 = vmatpush1.bf16.msra.mxu0 %v247
      %266 = vmatprep.subr.bf16.mxu0 0
      %267 = vmatpush1.bf16.msra.mxu0 %v246
      %268 = vmatprep.subr.bf16.mxu0 0
      %269 = vmatpush1.bf16.msra.mxu0 %v245
      %270 = vmatprep.subr.bf16.mxu0 0
      %271 = vmatpush1.bf16.msra.mxu0 %v244
      %272 = vmatprep.subr.bf16.mxu0 0
      %273 = vmatpush2.bf16.msra.mxu0 0
      %274 = vmatprep.subr.bf16.mxu0 0
      %275 = vmatpush2.bf16.msra.mxu0 0
      %276 = vmatprep.subr.bf16.mxu0 0
      %277 = vmatpush2.bf16.msra.mxu0 0
      %278 = vmatprep.subr.bf16.mxu0 0
      %279 = vmatpush2.bf16.msra.mxu0 0
      %280 = vmatprep.subr.bf16.mxu0 0
      %281 = vmatpush2.bf16.msra.mxu0 0
      %282 = vmatprep.subr.bf16.mxu0 0
      %283 = vmatpush2.bf16.msra.mxu0 0
      %284 = vmatprep.subr.bf16.mxu0 0
      %285 = vmatpush2.bf16.msra.mxu0 0
      %286 = vmatprep.subr.bf16.mxu0 0
      %287 = vmatpush2.bf16.msra.mxu0 0
      %288 = vmatprep.mubr.bf16.mxu0 0
      %289 = vmatmul.mubr.bf16.gmra.mxu0 %v254
      %v290 = vpop.f32.mrf.mxu0
      %v291 = vadd.f32 0.0, %v290
      %v292 = vpop.f32.mrf.mxu0
      %v293 = vpop.f32.mrf.mxu0
      %v294 = vadd.f32 0.0, %v293
      %v295 = vpop.f32.mrf.mxu0
      %296 = vdwg.mxu0
      %v305 = vunpack.c.l.b16 %v197
      %v306 = vunpack.c.l.b16 %v198
      %v307 = vunpack.c.l.b16 %v199
      %v308 = vunpack.c.l.b16 %v200
      %v309 = vunpack.c.l.b16 %v201
      %v310 = vunpack.c.l.b16 %v202
      %v311 = vunpack.c.l.b16 %v203
      %v312 = vunpack.c.l.b16 %v204
      %v313 = vpack.c.b16 %v306, %v305
      %v314 = vpack.c.b16 %v308, %v307
      %v315 = vpack.c.b16 %v310, %v309
      %v316 = vpack.c.b16 %v312, %v311
      %v321 = vsel %vm252, %v196, 0
      %323 = vmatprep.subr.bf16.mxu0 0
      %324 = vmatpush1.bf16.msra.mxu0 0
      %325 = vmatprep.subr.bf16.mxu0 0
      %326 = vmatpush1.bf16.msra.mxu0 0
      %327 = vmatprep.subr.bf16.mxu0 0
      %328 = vmatpush1.bf16.msra.mxu0 0
      %329 = vmatprep.subr.bf16.mxu0 0
      %330 = vmatpush1.bf16.msra.mxu0 0
      %331 = vmatprep.subr.bf16.mxu0 0
      %332 = vmatpush1.bf16.msra.mxu0 %v316
      %333 = vmatprep.subr.bf16.mxu0 0
      %334 = vmatpush1.bf16.msra.mxu0 %v315
      %335 = vmatprep.subr.bf16.mxu0 0
      %336 = vmatpush1.bf16.msra.mxu0 %v314
      %337 = vmatprep.subr.bf16.mxu0 0
      %338 = vmatpush1.bf16.msra.mxu0 %v313
      %339 = vmatprep.subr.bf16.mxu0 0
      %340 = vmatpush2.bf16.msra.mxu0 0
      %341 = vmatprep.subr.bf16.mxu0 0
      %342 = vmatpush2.bf16.msra.mxu0 0
      %343 = vmatprep.subr.bf16.mxu0 0
      %344 = vmatpush2.bf16.msra.mxu0 0
      %345 = vmatprep.subr.bf16.mxu0 0
      %346 = vmatpush2.bf16.msra.mxu0 0
      %347 = vmatprep.subr.bf16.mxu0 0
      %348 = vmatpush2.bf16.msra.mxu0 0
      %349 = vmatprep.subr.bf16.mxu0 0
      %350 = vmatpush2.bf16.msra.mxu0 0
      %351 = vmatprep.subr.bf16.mxu0 0
      %352 = vmatpush2.bf16.msra.mxu0 0
      %353 = vmatprep.subr.bf16.mxu0 0
      %354 = vmatpush2.bf16.msra.mxu0 0
      %355 = vmatprep.mubr.bf16.mxu0 0
      %356 = vmatmul.mubr.bf16.gmra.mxu0 %v321
      %v357 = vpop.f32.mrf.mxu0
      %v358 = vadd.f32 %v291, %v357
      %v359 = vpop.f32.mrf.mxu0
      %v360 = vpop.f32.mrf.mxu0
      %v361 = vadd.f32 %v294, %v360
      %v362 = vpop.f32.mrf.mxu0
      %363 = vdwg.mxu0
      %s364 = scalar_lea.vmem %s1, 64
      %v365 = vld [vmem:[%s364] sm:$0xf]
      %v366 = vld [vmem:[%s364 + $0x4] sm:$0xf]
      %v367 = vld [vmem:[%s364 + $0x8] sm:$0xf]
      %v368 = vld [vmem:[%s364 + $0xc] sm:$0xf]
      %v369 = vld [vmem:[%s364 + $0x10] sm:$0xf]
      %v370 = vld [vmem:[%s364 + $0x14] sm:$0xf]
      %v371 = vld [vmem:[%s364 + $0x18] sm:$0xf]
      %v372 = vld [vmem:[%s364 + $0x1c] sm:$0xf]
      %vm375 = vcmask 1046528
      %v376 = vrot.slane %v196, 1
      %v377 = vrot.slane %v205, 1
      %v378 = vsel %vm375, %v376, %v377
      %v387 = vunpack.c.l.b16 %v365
      %v388 = vunpack.c.l.b16 %v366
      %v389 = vunpack.c.l.b16 %v367
      %v390 = vunpack.c.l.b16 %v368
      %v391 = vunpack.c.l.b16 %v369
      %v392 = vunpack.c.l.b16 %v370
      %v393 = vunpack.c.l.b16 %v371
      %v394 = vunpack.c.l.b16 %v372
      %v395 = vpack.c.b16 %v388, %v387
      %v396 = vpack.c.b16 %v390, %v389
      %v397 = vpack.c.b16 %v392, %v391
      %v398 = vpack.c.b16 %v394, %v393
      %v404 = vsel %vm252, %v378, 0
      %406 = vmatprep.subr.bf16.mxu0 0
      %407 = vmatpush1.bf16.msra.mxu0 0
      %408 = vmatprep.subr.bf16.mxu0 0
      %409 = vmatpush1.bf16.msra.mxu0 0
      %410 = vmatprep.subr.bf16.mxu0 0
      %411 = vmatpush1.bf16.msra.mxu0 0
      %412 = vmatprep.subr.bf16.mxu0 0
      %413 = vmatpush1.bf16.msra.mxu0 0
      %414 = vmatprep.subr.bf16.mxu0 0
      %415 = vmatpush1.bf16.msra.mxu0 %v398
      %416 = vmatprep.subr.bf16.mxu0 0
      %417 = vmatpush1.bf16.msra.mxu0 %v397
      %418 = vmatprep.subr.bf16.mxu0 0
      %419 = vmatpush1.bf16.msra.mxu0 %v396
      %420 = vmatprep.subr.bf16.mxu0 0
      %421 = vmatpush1.bf16.msra.mxu0 %v395
      %422 = vmatprep.subr.bf16.mxu0 0
      %423 = vmatpush2.bf16.msra.mxu0 0
      %424 = vmatprep.subr.bf16.mxu0 0
      %425 = vmatpush2.bf16.msra.mxu0 0
      %426 = vmatprep.subr.bf16.mxu0 0
      %427 = vmatpush2.bf16.msra.mxu0 0
      %428 = vmatprep.subr.bf16.mxu0 0
      %429 = vmatpush2.bf16.msra.mxu0 0
      %430 = vmatprep.subr.bf16.mxu0 0
      %431 = vmatpush2.bf16.msra.mxu0 0
      %432 = vmatprep.subr.bf16.mxu0 0
      %433 = vmatpush2.bf16.msra.mxu0 0
      %434 = vmatprep.subr.bf16.mxu0 0
      %435 = vmatpush2.bf16.msra.mxu0 0
      %436 = vmatprep.subr.bf16.mxu0 0
      %437 = vmatpush2.bf16.msra.mxu0 0
      %438 = vmatprep.mubr.bf16.mxu0 0
      %439 = vmatmul.mubr.bf16.gmra.mxu0 %v404
      %v440 = vpop.f32.mrf.mxu0
      %v441 = vadd.f32 0.0, %v440
      %v442 = vpop.f32.mrf.mxu0
      %v443 = vpop.f32.mrf.mxu0
      %v444 = vadd.f32 0.0, %v443
      %v445 = vpop.f32.mrf.mxu0
      %446 = vdwg.mxu0
      %v447 = vadd.f32 %v358, %v441
      %v448 = vadd.f32 %v361, %v444
      %v449 = vadd.f32 %v447, %v448
      %v450 = vrot.slane %v449, 4
      %v451 = vadd.f32 %v449, %v450
      %v452 = vrot.slane %v451, 2
      %v453 = vadd.f32 %v451, %v452
      %v454 = vrot.slane %v453, 1
      %v455 = vadd.f32 %v453, %v454
      %v456 = vmul.f32 %v447, %v447
      %v457 = vmul.f32 %v448, %v448
      %v458 = vadd.f32 %v456, %v457
      %v459 = vrot.slane %v458, 4
      %v460 = vadd.f32 %v458, %v459
      %v461 = vrot.slane %v460, 2
      %v462 = vadd.f32 %v460, %v461
      %v463 = vrot.slane %v462, 1
      %v464 = vadd.f32 %v462, %v463
      %v465 = vsel %vm187, %v455, %v464
      %466 = vst [vmem:[%s181] sm:$0x3] %v465
      %467 = vst [vmem:[%s177] sm:$0xff] %v447
      %468 = vst [vmem:[%s177 + $0x8] sm:$0xff] %v448
      %p469 = scmp.lt.s32.totalorder %s15, 1
      %s470 = scalar_select %p469, %s15, 1
      %s471 = smul.addr %s470, 2
      %s472 = smul.addr %s471, 8
      %s473 = scalar_lea.vmem %s2, %s472
      %p474 = scmp.lt.s32.totalorder %s15, 1
      %s475 = scalar_select %p474, %s15, 1
      %s476 = smul.addr %s475, 2
      %s477 = scalar_lea.vmem %s3, %s476
      // Predicated region
      $region29: #{double_conv2d.3} parent=27 // pred_check
        %p478 = pneg %p80
      $region30: #{double_conv2d.3} parent=27 // pred_check_branch
        %480 = sbr.rel (%p478) target = $region32
      $region31: #{double_conv2d.3} parent=27 // pred_region
        _
      $region32: #{double_conv2d.3} parent=27 // pred_fallthru
        _
      // Predicated region
      $region33: #{double_conv2d.3} parent=27 // pred_check
        %p481 = pneg %p106
      $region34: #{double_conv2d.3} parent=27 // pred_check_branch
        %483 = sbr.rel (%p481) target = $region36
      $region35: #{double_conv2d.3} parent=27 // pred_region
        _
      $region36: #{double_conv2d.3} parent=27 // pred_fallthru
        _
    $region28: #{double_conv2d.3} parent=5 // pred_fallthru
      _
    %p484 = scmp.le.s32.totalorder 2, %s10
    // Predicated region
    $region37: #{double_conv2d.3} parent=5 // pred_check
      %p485 = pneg %p484
    $region38: #{double_conv2d.3} parent=5 // pred_check_branch
      %487 = sbr.rel (%p485) target = $region40
    $region39: #{double_conv2d.3} parent=5 // pred_region
      %s488 = ssub.s32 %s10, 2
      // Predicated region
      $region41: #{double_conv2d.3} parent=39 // pred_check
        %p489 = pneg %p86
      $region42: #{double_conv2d.3} parent=39 // pred_check_branch
        %491 = sbr.rel (%p489) target = $region44
      $region43: #{double_conv2d.3} parent=39 // pred_region
        %p492 = scmp.lt.s32.totalorder %s16, 1
        %s493 = scalar_select %p492, %s16, 1
        %s494 = smul.addr %s493, 2
        %s495 = smul.addr %s494, 8
        %s496 = scalar_lea.vmem %s2, %s495
      $region44: #{double_conv2d.3} parent=39 // pred_fallthru
        _
      // Predicated region
      $region45: #{double_conv2d.3} parent=39 // pred_check
        %p497 = pneg %p112
      $region46: #{double_conv2d.3} parent=39 // pred_check_branch
        %499 = sbr.rel (%p497) target = $region48
      $region47: #{double_conv2d.3} parent=39 // pred_region
        %p500 = scmp.lt.s32.totalorder %s16, 1
        %s501 = scalar_select %p500, %s16, 1
        %s502 = smul.addr %s501, 2
        %s503 = scalar_lea.vmem %s3, %s502
      $region48: #{double_conv2d.3} parent=39 // pred_fallthru
        _
    $region40: #{double_conv2d.3} parent=5 // pred_fallthru
      _
  $region6: #{double_conv2d.3} parent=0 // loop_footer
    %s14 = sadd.s32 1, %s10
  $region7: #{double_conv2d.3} parent=0 // loop_footer_branch
    %9 = sbr.rel target = $region3
  $region8: #{double_conv2d.3} parent=0 // loop_exit
    _

// kernel: double_conv2d.5
$region0: #{double_conv2d.5}
  #allocation0 [shape = 'u32[]', space=smem, size = 0x4, offset = 0x4, fixed_abs, tag = 'smem constant byte address 0x4 - core index']
  #allocation1 [shape = 'u32[144,128]{1,0:T(1,128)}', space=vmem, size = 0x12000, scoped, tag = 'internal scratch']
  %s0 = inlined_call_operand.vmem [shape: f32[2,16,128], index: 0, kind: input, shape index: {}]
  %s1 = inlined_call_operand.vmem [shape: f32[1,128], index: 1, kind: input, shape index: {}]
  %s2 = inlined_call_operand.vmem [shape: f32[1,128], index: 2, kind: input, shape index: {}]
  %s3 = inlined_call_operand.vmem [shape: f32[2,16,128], index: 3, kind: output, shape index: {}]
  %s4 = sld [smem:[#allocation0]]
  $region45: #{double_conv2d.5} parent=0
    _
  %s6 = ssub.s32 1, %s4
  %s7 = scalar_select 0, %s6, %s4
  loop: start=0, step=1, limit=4
  $region2: #{double_conv2d.5} parent=0 // loop_pre_header
    _
  $region3: #{double_conv2d.5} parent=0 // loop_header
    %s9 = sphi 0, %s13
    %p10 = scmp.ge.s32.totalorder %s9, 4
    %s19 = sphi 0, %s21
    %s22 = sphi 0, %s19
    %s23 = sphi 0, %s22
    %s39 = sphi 0, %s23
    %s43 = sphi 0, %s43
    %s45 = sphi 0, %s43
    %s46 = sphi 0, %s45
    %s60 = sphi 0, %s46
    %s64 = sphi 0, %s64
    %s66 = sphi 0, %s64
    %s67 = sphi 0, %s66
    %s81 = sphi 0, %s67
    %s87 = sphi 0, %s89
    %s90 = sphi 0, %s87
    %s91 = sphi 0, %s90
    %s107 = sphi 0, %s91
  $region4: #{double_conv2d.5} parent=0 // loop_header_branch
    %12 = sbr.rel (%p10) target = $region8
  $region5: #{double_conv2d.5} parent=0 // loop_body
    %s14 = ssub.s32 %s9, 1
    %s15 = ssub.s32 %s9, 2
    %s16 = sadd.s32 %s9, 1
    %s17 = ssub.s32 %s9, %s16
    %p18 = scmp.eq.s32.totalorder %s17, 0
    %s20 = sadd.s32 %s19, 1
    %s21 = scalar_select %p18, %s19, %s20
    %p24 = pneg %p18
    %p25 = scmp.eq.s32.totalorder %s9, 1
    %p26 = por %p24, %p25
    %p27 = scmp.ne.s32.totalorder %s19, %s22
    %p28 = scmp.eq.s32.totalorder %s9, 0
    %p29 = por %p27, %p28
    %p30 = scmp.ne.s32.totalorder %s19, %s22
    %p31 = scmp.eq.s32.totalorder %s14, 1
    %p32 = por %p30, %p31
    %p33 = scmp.ne.s32.totalorder %s22, %s23
    %p34 = scmp.eq.s32.totalorder %s14, 0
    %p35 = por %p33, %p34
    %p36 = scmp.ne.s32.totalorder %s22, %s23
    %p37 = scmp.eq.s32.totalorder %s15, 1
    %p38 = por %p36, %p37
    %p40 = scmp.ne.s32.totalorder %s23, %s39
    %p41 = scmp.eq.s32.totalorder %s15, 0
    %p42 = por %p40, %p41
    %s44 = sadd.s32 %s43, 1
    %p47 = scmp.eq.s32.totalorder %s9, 1
    %p48 = scmp.ne.s32.totalorder %s43, %s45
    %p49 = scmp.eq.s32.totalorder %s9, 0
    %p50 = por %p48, %p49
    %p51 = scmp.ne.s32.totalorder %s43, %s45
    %p52 = scmp.eq.s32.totalorder %s14, 1
    %p53 = por %p51, %p52
    %p54 = scmp.ne.s32.totalorder %s45, %s46
    %p55 = scmp.eq.s32.totalorder %s14, 0
    %p56 = por %p54, %p55
    %p57 = scmp.ne.s32.totalorder %s45, %s46
    %p58 = scmp.eq.s32.totalorder %s15, 1
    %p59 = por %p57, %p58
    %p61 = scmp.ne.s32.totalorder %s46, %s60
    %p62 = scmp.eq.s32.totalorder %s15, 0
    %p63 = por %p61, %p62
    %s65 = sadd.s32 %s64, 1
    %p68 = scmp.eq.s32.totalorder %s9, 1
    %p69 = scmp.ne.s32.totalorder %s64, %s66
    %p70 = scmp.eq.s32.totalorder %s9, 0
    %p71 = por %p69, %p70
    %p72 = scmp.ne.s32.totalorder %s64, %s66
    %p73 = scmp.eq.s32.totalorder %s14, 1
    %p74 = por %p72, %p73
    %p75 = scmp.ne.s32.totalorder %s66, %s67
    %p76 = scmp.eq.s32.totalorder %s14, 0
    %p77 = por %p75, %p76
    %p78 = scmp.ne.s32.totalorder %s66, %s67
    %p79 = scmp.eq.s32.totalorder %s15, 1
    %p80 = por %p78, %p79
    %p82 = scmp.ne.s32.totalorder %s67, %s81
    %p83 = scmp.eq.s32.totalorder %s15, 0
    %p84 = por %p82, %p83
    %s85 = ssub.s32 %s9, %s16
    %p86 = scmp.eq.s32.totalorder %s85, 0
    %s88 = sadd.s32 %s87, 1
    %s89 = scalar_select %p86, %s87, %s88
    %p92 = pneg %p86
    %p93 = scmp.eq.s32.totalorder %s9, 1
    %p94 = por %p92, %p93
    %p95 = scmp.ne.s32.totalorder %s87, %s90
    %p96 = scmp.eq.s32.totalorder %s9, 0
    %p97 = por %p95, %p96
    %p98 = scmp.ne.s32.totalorder %s87, %s90
    %p99 = scmp.eq.s32.totalorder %s14, 1
    %p100 = por %p98, %p99
    %p101 = scmp.ne.s32.totalorder %s90, %s91
    %p102 = scmp.eq.s32.totalorder %s14, 0
    %p103 = por %p101, %p102
    %p104 = scmp.ne.s32.totalorder %s90, %s91
    %p105 = scmp.eq.s32.totalorder %s15, 1
    %p106 = por %p104, %p105
    %p108 = scmp.ne.s32.totalorder %s91, %s107
    %p109 = scmp.eq.s32.totalorder %s15, 0
    %p110 = por %p108, %p109
    %p111 = scmp.le.s32.totalorder 1, %s9
    %p112 = scmp.lt.s32.totalorder %s9, 3
    %p113 = pnand %p111, %p112
    %p114 = pneg %p113
    // Predicated region
    $region9: #{double_conv2d.5} parent=5 // pred_check
      _
    $region10: #{double_conv2d.5} parent=5 // pred_check_branch
      %116 = sbr.rel (%p113) target = $region12
    $region11: #{double_conv2d.5} parent=5 // pred_region
      %s117 = ssub.s32 %s9, 1
      // Predicated region
      $region13: #{double_conv2d.5} parent=11 // pred_check
        %p118 = pneg %p56
      $region14: #{double_conv2d.5} parent=11 // pred_check_branch
        %120 = sbr.rel (%p118) target = $region16
      $region15: #{double_conv2d.5} parent=11 // pred_region
        _
      $region16: #{double_conv2d.5} parent=11 // pred_fallthru
        _
      // Predicated region
      $region17: #{double_conv2d.5} parent=11 // pred_check
        %p121 = pneg %p77
      $region18: #{double_conv2d.5} parent=11 // pred_check_branch
        %123 = sbr.rel (%p121) target = $region20
      $region19: #{double_conv2d.5} parent=11 // pred_region
        _
      $region20: #{double_conv2d.5} parent=11 // pred_fallthru
        _
    $region12: #{double_conv2d.5} parent=5 // pred_fallthru
      _
    %p124 = scmp.lt.s32.totalorder %s9, 2
    // Predicated region
    $region21: #{double_conv2d.5} parent=5 // pred_check
      %p125 = pneg %p124
    $region22: #{double_conv2d.5} parent=5 // pred_check_branch
      %127 = sbr.rel (%p125) target = $region24
    $region23: #{double_conv2d.5} parent=5 // pred_region
      // Predicated region
      $region25: #{double_conv2d.5} parent=23 // pred_check
        %p128 = pneg %p29
      $region26: #{double_conv2d.5} parent=23 // pred_check_branch
        %130 = sbr.rel (%p128) target = $region28
      $region27: #{double_conv2d.5} parent=23 // pred_region
        %p131 = scmp.lt.s32.totalorder %s9, 1
        %s132 = scalar_select %p131, %s9, 1
        %s133 = smul.addr %s132, 2
        %s134 = smul.addr %s133, 8
        %s135 = scalar_lea.vmem %s0, %s134
      $region28: #{double_conv2d.5} parent=23 // pred_fallthru
        _
    $region24: #{double_conv2d.5} parent=5 // pred_fallthru
      _
    %p136 = scmp.le.s32.totalorder 1, %s9
    %p137 = scmp.lt.s32.totalorder %s9, 3
    %p138 = pnand %p136, %p137
    %p139 = pneg %p138
    // Predicated region
    $region29: #{double_conv2d.5} parent=5 // pred_check
      _
    $region30: #{double_conv2d.5} parent=5 // pred_check_branch
      %141 = sbr.rel (%p138) target = $region32
    $region31: #{double_conv2d.5} parent=5 // pred_region
      %s142 = ssub.s32 %s9, 1
      %p143 = scmp.lt.s32.totalorder %s14, 1
      %s144 = scalar_select %p143, %s14, 1
      %s145 = smul.addr %s144, 2
      %s146 = smul.addr %s145, 8
      %s147 = scalar_lea.vmem %s0, %s146
      %p148 = pneg %p35
      %p149 = pneg %p32
      %p150 = pneg %p56
      %p151 = pneg %p53
      %p152 = pneg %p77
      %p153 = pneg %p74
      %p154 = pneg %p103
      %p155 = pneg %p100
      %p156 = scmp.lt.s32.totalorder %s14, 1
      %s157 = scalar_select %p156, %s14, 1
      %s158 = smul.addr %s157, 2
      %s159 = smul.addr %s158, 8
      %s160 = scalar_lea.vmem %s3, %s159
      %p161 = scmp.lt.s32.totalorder %s14, 1
      %s162 = scalar_select %p161, %s14, 1
      %s163 = smul.addr %s162, 2
      %s164 = smul.addr %s163, 8
      %s165 = scalar_lea.vmem %s0, %s164
      %p166 = scmp.lt.s32.totalorder %s14, 1
      %s167 = scalar_select %p166, %s14, 1
      %s168 = smul.addr %s167, 2
      %s169 = smul.addr %s168, 8
      %s170 = scalar_lea.vmem %s3, %s169
      %v171 = vld [vmem:[%s165] sm:$0xff]
      %v172 = vld [vmem:[%s165 + $0x8] sm:$0xff]
      %v173 = vld [vmem:[%s1] sm:$0x1]
      %v175 = vlaneseq
      %v176 = vshrl.u32 %v175, 7
      %v177 = vsub.s32 0, %v176
      %v178 = vrot.slane %v173, %v177
      %v180 = vmul.f32 %v171, %v178
      %v181 = vmul.f32 %v172, %v178
      %v182 = vld [vmem:[%s2] sm:$0x1]
      %v184 = vlaneseq
      %v185 = vshrl.u32 %v184, 7
      %v186 = vsub.s32 0, %v185
      %v187 = vrot.slane %v182, %v186
      %v189 = vadd.f32 %v180, %v187
      %v190 = vadd.f32 %v181, %v187
      %v191 = vmax.f32 %v189, 0.0
      %v192 = vmax.f32 %v190, 0.0
      %193 = vst [vmem:[%s170] sm:$0xff] %v191
      %194 = vst [vmem:[%s170 + $0x8] sm:$0xff] %v192
      %p195 = scmp.lt.s32.totalorder %s14, 1
      %s196 = scalar_select %p195, %s14, 1
      %s197 = smul.addr %s196, 2
      %s198 = smul.addr %s197, 8
      %s199 = scalar_lea.vmem %s3, %s198
      // Predicated region
      $region33: #{double_conv2d.5} parent=31 // pred_check
        %p200 = pneg %p100
      $region34: #{double_conv2d.5} parent=31 // pred_check_branch
        %202 = sbr.rel (%p200) target = $region36
      $region35: #{double_conv2d.5} parent=31 // pred_region
        _
      $region36: #{double_conv2d.5} parent=31 // pred_fallthru
        _
    $region32: #{double_conv2d.5} parent=5 // pred_fallthru
      _
    %p203 = scmp.le.s32.totalorder 2, %s9
    // Predicated region
    $region37: #{double_conv2d.5} parent=5 // pred_check
      %p204 = pneg %p203
    $region38: #{double_conv2d.5} parent=5 // pred_check_branch
      %206 = sbr.rel (%p204) target = $region40
    $region39: #{double_conv2d.5} parent=5 // pred_region
      %s207 = ssub.s32 %s9, 2
      // Predicated region
      $region41: #{double_conv2d.5} parent=39 // pred_check
        %p208 = pneg %p106
      $region42: #{double_conv2d.5} parent=39 // pred_check_branch
        %210 = sbr.rel (%p208) target = $region44
      $region43: #{double_conv2d.5} parent=39 // pred_region
        %p211 = scmp.lt.s32.totalorder %s15, 1
        %s212 = scalar_select %p211, %s15, 1
        %s213 = smul.addr %s212, 2
        %s214 = smul.addr %s213, 8
        %s215 = scalar_lea.vmem %s3, %s214
      $region44: #{double_conv2d.5} parent=39 // pred_fallthru
        _
    $region40: #{double_conv2d.5} parent=5 // pred_fallthru
      _
  $region6: #{double_conv2d.5} parent=0 // loop_footer
    %s13 = sadd.s32 1, %s9
  $region7: #{double_conv2d.5} parent=0 // loop_footer_branch
    %8 = sbr.rel target = $region3
  $region8: #{double_conv2d.5} parent=0 // loop_exit
    _

// kernel: double_conv2d.4
$region0: #{double_conv2d.4}
  #allocation0 [shape = 'u32[]', space=smem, size = 0x4, offset = 0x4, fixed_abs, tag = 'smem constant byte address 0x4 - core index']
  #allocation1 [shape = 'u32[144,128]{1,0:T(1,128)}', space=vmem, size = 0x12000, scoped, tag = 'internal scratch']
  %s0 = inlined_call_operand.vmem [shape: f32[2,16,128], index: 0, kind: input, shape index: {}]
  %s1 = inlined_call_operand.vmem [shape: f32[1,128], index: 1, kind: input, shape index: {}]
  %s2 = inlined_call_operand.vmem [shape: f32[1,128], index: 2, kind: input, shape index: {}]
  %s3 = inlined_call_operand.vmem [shape: bf16[3,128,128], index: 3, kind: input, shape index: {}]
  %s4 = inlined_call_operand.vmem [shape: f32[2,16,128], index: 4, kind: output, shape index: {0}]
  %s5 = inlined_call_operand.vmem [shape: f32[2,2,128], index: 5, kind: output, shape index: {1}]
  %6 = xla_tuple %s4, %s5
  %s7 = sld [smem:[#allocation0]]
  $region57: #{double_conv2d.4} parent=0
    _
  %s9 = ssub.s32 1, %s7
  %s10 = scalar_select 0, %s9, %s7
  loop: start=0, step=1, limit=4
  $region2: #{double_conv2d.4} parent=0 // loop_pre_header
    _
  $region3: #{double_conv2d.4} parent=0 // loop_header
    %s12 = sphi 0, %s16
    %p13 = scmp.ge.s32.totalorder %s12, 4
    %s22 = sphi 0, %s24
    %s25 = sphi 0, %s22
    %s26 = sphi 0, %s25
    %s42 = sphi 0, %s26
    %s46 = sphi 0, %s46
    %s48 = sphi 0, %s46
    %s49 = sphi 0, %s48
    %s63 = sphi 0, %s49
    %s67 = sphi 0, %s67
    %s69 = sphi 0, %s67
    %s70 = sphi 0, %s69
    %s84 = sphi 0, %s70
    %s88 = sphi 0, %s88
    %s90 = sphi 0, %s88
    %s91 = sphi 0, %s90
    %s105 = sphi 0, %s91
    %s111 = sphi 0, %s113
    %s114 = sphi 0, %s111
    %s115 = sphi 0, %s114
    %s131 = sphi 0, %s115
    %s137 = sphi 0, %s139
    %s140 = sphi 0, %s137
    %s141 = sphi 0, %s140
    %s157 = sphi 0, %s141
  $region4: #{double_conv2d.4} parent=0 // loop_header_branch
    %15 = sbr.rel (%p13) target = $region8
  $region5: #{double_conv2d.4} parent=0 // loop_body
    %s17 = ssub.s32 %s12, 1
    %s18 = ssub.s32 %s12, 2
    %s19 = sadd.s32 %s12, 1
    %s20 = ssub.s32 %s12, %s19
    %p21 = scmp.eq.s32.totalorder %s20, 0
    %s23 = sadd.s32 %s22, 1
    %s24 = scalar_select %p21, %s22, %s23
    %p27 = pneg %p21
    %p28 = scmp.eq.s32.totalorder %s12, 1
    %p29 = por %p27, %p28
    %p30 = scmp.ne.s32.totalorder %s22, %s25
    %p31 = scmp.eq.s32.totalorder %s12, 0
    %p32 = por %p30, %p31
    %p33 = scmp.ne.s32.totalorder %s22, %s25
    %p34 = scmp.eq.s32.totalorder %s17, 1
    %p35 = por %p33, %p34
    %p36 = scmp.ne.s32.totalorder %s25, %s26
    %p37 = scmp.eq.s32.totalorder %s17, 0
    %p38 = por %p36, %p37
    %p39 = scmp.ne.s32.totalorder %s25, %s26
    %p40 = scmp.eq.s32.totalorder %s18, 1
    %p41 = por %p39, %p40
    %p43 = scmp.ne.s32.totalorder %s26, %s42
    %p44 = scmp.eq.s32.totalorder %s18, 0
    %p45 = por %p43, %p44
    %s47 = sadd.s32 %s46, 1
    %p50 = scmp.eq.s32.totalorder %s12, 1
    %p51 = scmp.ne.s32.totalorder %s46, %s48
    %p52 = scmp.eq.s32.totalorder %s12, 0
    %p53 = por %p51, %p52
    %p54 = scmp.ne.s32.totalorder %s46, %s48
    %p55 = scmp.eq.s32.totalorder %s17, 1
    %p56 = por %p54, %p55
    %p57 = scmp.ne.s32.totalorder %s48, %s49
    %p58 = scmp.eq.s32.totalorder %s17, 0
    %p59 = por %p57, %p58
    %p60 = scmp.ne.s32.totalorder %s48, %s49
    %p61 = scmp.eq.s32.totalorder %s18, 1
    %p62 = por %p60, %p61
    %p64 = scmp.ne.s32.totalorder %s49, %s63
    %p65 = scmp.eq.s32.totalorder %s18, 0
    %p66 = por %p64, %p65
    %s68 = sadd.s32 %s67, 1
    %p71 = scmp.eq.s32.totalorder %s12, 1
    %p72 = scmp.ne.s32.totalorder %s67, %s69
    %p73 = scmp.eq.s32.totalorder %s12, 0
    %p74 = por %p72, %p73
    %p75 = scmp.ne.s32.totalorder %s67, %s69
    %p76 = scmp.eq.s32.totalorder %s17, 1
    %p77 = por %p75, %p76
    %p78 = scmp.ne.s32.totalorder %s69, %s70
    %p79 = scmp.eq.s32.totalorder %s17, 0
    %p80 = por %p78, %p79
    %p81 = scmp.ne.s32.totalorder %s69, %s70
    %p82 = scmp.eq.s32.totalorder %s18, 1
    %p83 = por %p81, %p82
    %p85 = scmp.ne.s32.totalorder %s70, %s84
    %p86 = scmp.eq.s32.totalorder %s18, 0
    %p87 = por %p85, %p86
    %s89 = sadd.s32 %s88, 1
    %p92 = scmp.eq.s32.totalorder %s12, 1
    %p93 = scmp.ne.s32.totalorder %s88, %s90
    %p94 = scmp.eq.s32.totalorder %s12, 0
    %p95 = por %p93, %p94
    %p96 = scmp.ne.s32.totalorder %s88, %s90
    %p97 = scmp.eq.s32.totalorder %s17, 1
    %p98 = por %p96, %p97
    %p99 = scmp.ne.s32.totalorder %s90, %s91
    %p100 = scmp.eq.s32.totalorder %s17, 0
    %p101 = por %p99, %p100
    %p102 = scmp.ne.s32.totalorder %s90, %s91
    %p103 = scmp.eq.s32.totalorder %s18, 1
    %p104 = por %p102, %p103
    %p106 = scmp.ne.s32.totalorder %s91, %s105
    %p107 = scmp.eq.s32.totalorder %s18, 0
    %p108 = por %p106, %p107
    %s109 = ssub.s32 %s12, %s19
    %p110 = scmp.eq.s32.totalorder %s109, 0
    %s112 = sadd.s32 %s111, 1
    %s113 = scalar_select %p110, %s111, %s112
    %p116 = pneg %p110
    %p117 = scmp.eq.s32.totalorder %s12, 1
    %p118 = por %p116, %p117
    %p119 = scmp.ne.s32.totalorder %s111, %s114
    %p120 = scmp.eq.s32.totalorder %s12, 0
    %p121 = por %p119, %p120
    %p122 = scmp.ne.s32.totalorder %s111, %s114
    %p123 = scmp.eq.s32.totalorder %s17, 1
    %p124 = por %p122, %p123
    %p125 = scmp.ne.s32.totalorder %s114, %s115
    %p126 = scmp.eq.s32.totalorder %s17, 0
    %p127 = por %p125, %p126
    %p128 = scmp.ne.s32.totalorder %s114, %s115
    %p129 = scmp.eq.s32.totalorder %s18, 1
    %p130 = por %p128, %p129
    %p132 = scmp.ne.s32.totalorder %s115, %s131
    %p133 = scmp.eq.s32.totalorder %s18, 0
    %p134 = por %p132, %p133
    %s135 = ssub.s32 %s12, %s19
    %p136 = scmp.eq.s32.totalorder %s135, 0
    %s138 = sadd.s32 %s137, 1
    %s139 = scalar_select %p136, %s137, %s138
    %p142 = pneg %p136
    %p143 = scmp.eq.s32.totalorder %s12, 1
    %p144 = por %p142, %p143
    %p145 = scmp.ne.s32.totalorder %s137, %s140
    %p146 = scmp.eq.s32.totalorder %s12, 0
    %p147 = por %p145, %p146
    %p148 = scmp.ne.s32.totalorder %s137, %s140
    %p149 = scmp.eq.s32.totalorder %s17, 1
    %p150 = por %p148, %p149
    %p151 = scmp.ne.s32.totalorder %s140, %s141
    %p152 = scmp.eq.s32.totalorder %s17, 0
    %p153 = por %p151, %p152
    %p154 = scmp.ne.s32.totalorder %s140, %s141
    %p155 = scmp.eq.s32.totalorder %s18, 1
    %p156 = por %p154, %p155
    %p158 = scmp.ne.s32.totalorder %s141, %s157
    %p159 = scmp.eq.s32.totalorder %s18, 0
    %p160 = por %p158, %p159
    %p161 = scmp.le.s32.totalorder 1, %s12
    %p162 = scmp.lt.s32.totalorder %s12, 3
    %p163 = pnand %p161, %p162
    %p164 = pneg %p163
    // Predicated region
    $region9: #{double_conv2d.4} parent=5 // pred_check
      _
    $region10: #{double_conv2d.4} parent=5 // pred_check_branch
      %166 = sbr.rel (%p163) target = $region12
    $region11: #{double_conv2d.4} parent=5 // pred_region
      %s167 = ssub.s32 %s12, 1
      // Predicated region
      $region13: #{double_conv2d.4} parent=11 // pred_check
        %p168 = pneg %p59
      $region14: #{double_conv2d.4} parent=11 // pred_check_branch
        %170 = sbr.rel (%p168) target = $region16
      $region15: #{double_conv2d.4} parent=11 // pred_region
        _
      $region16: #{double_conv2d.4} parent=11 // pred_fallthru
        _
      // Predicated region
      $region17: #{double_conv2d.4} parent=11 // pred_check
        %p171 = pneg %p80
      $region18: #{double_conv2d.4} parent=11 // pred_check_branch
        %173 = sbr.rel (%p171) target = $region20
      $region19: #{double_conv2d.4} parent=11 // pred_region
        _
      $region20: #{double_conv2d.4} parent=11 // pred_fallthru
        _
      // Predicated region
      $region21: #{double_conv2d.4} parent=11 // pred_check
        %p174 = pneg %p101
      $region22: #{double_conv2d.4} parent=11 // pred_check_branch
        %176 = sbr.rel (%p174) target = $region24
      $region23: #{double_conv2d.4} parent=11 // pred_region
        _
      $region24: #{double_conv2d.4} parent=11 // pred_fallthru
        _
    $region12: #{double_conv2d.4} parent=5 // pred_fallthru
      _
    %p177 = scmp.lt.s32.totalorder %s12, 2
    // Predicated region
    $region25: #{double_conv2d.4} parent=5 // pred_check
      %p178 = pneg %p177
    $region26: #{double_conv2d.4} parent=5 // pred_check_branch
      %180 = sbr.rel (%p178) target = $region28
    $region27: #{double_conv2d.4} parent=5 // pred_region
      // Predicated region
      $region29: #{double_conv2d.4} parent=27 // pred_check
        %p181 = pneg %p32
      $region30: #{double_conv2d.4} parent=27 // pred_check_branch
        %183 = sbr.rel (%p181) target = $region32
      $region31: #{double_conv2d.4} parent=27 // pred_region
        %p184 = scmp.lt.s32.totalorder %s12, 1
        %s185 = scalar_select %p184, %s12, 1
        %s186 = smul.addr %s185, 2
        %s187 = smul.addr %s186, 8
        %s188 = scalar_lea.vmem %s0, %s187
      $region32: #{double_conv2d.4} parent=27 // pred_fallthru
        _
    $region28: #{double_conv2d.4} parent=5 // pred_fallthru
      _
    %p189 = scmp.le.s32.totalorder 1, %s12
    %p190 = scmp.lt.s32.totalorder %s12, 3
    %p191 = pnand %p189, %p190
    %p192 = pneg %p191
    // Predicated region
    $region33: #{double_conv2d.4} parent=5 // pred_check
      _
    $region34: #{double_conv2d.4} parent=5 // pred_check_branch
      %194 = sbr.rel (%p191) target = $region36
    $region35: #{double_conv2d.4} parent=5 // pred_region
      %s195 = ssub.s32 %s12, 1
      %p196 = scmp.lt.s32.totalorder %s17, 1
      %s197 = scalar_select %p196, %s17, 1
      %s198 = smul.addr %s197, 2
      %s199 = smul.addr %s198, 8
      %s200 = scalar_lea.vmem %s0, %s199
      %p201 = pneg %p38
      %p202 = pneg %p35
      %p203 = pneg %p59
      %p204 = pneg %p56
      %p205 = pneg %p80
      %p206 = pneg %p77
      %p207 = pneg %p101
      %p208 = pneg %p98
      %p209 = pneg %p127
      %p210 = pneg %p124
      %p211 = scmp.lt.s32.totalorder %s17, 1
      %s212 = scalar_select %p211, %s17, 1
      %s213 = smul.addr %s212, 2
      %s214 = smul.addr %s213, 8
      %s215 = scalar_lea.vmem %s4, %s214
      %p216 = pneg %p153
      %p217 = pneg %p150
      %p218 = scmp.lt.s32.totalorder %s17, 1
      %s219 = scalar_select %p218, %s17, 1
      %s220 = smul.addr %s219, 2
      %s221 = scalar_lea.vmem %s5, %s220
      %p222 = scmp.lt.s32.totalorder %s17, 1
      %s223 = scalar_select %p222, %s17, 1
      %s224 = smul.addr %s223, 2
      %s225 = smul.addr %s224, 8
      %s226 = scalar_lea.vmem %s0, %s225
      %p227 = scmp.lt.s32.totalorder %s17, 1
      %s228 = scalar_select %p227, %s17, 1
      %s229 = smul.addr %s228, 2
      %s230 = smul.addr %s229, 8
      %s231 = scalar_lea.vmem %s4, %s230
      %p232 = scmp.lt.s32.totalorder %s17, 1
      %s233 = scalar_select %p232, %s17, 1
      %s234 = smul.addr %s233, 2
      %s235 = scalar_lea.vmem %s5, %s234
      %v237 = vld [vmem:[%s226] sm:$0xff]
      %v238 = vld [vmem:[%s226 + $0x8] sm:$0xff]
      %v239 = vld [vmem:[%s1] sm:$0x1]
      %v241 = vlaneseq
      %v242 = vshrl.u32 %v241, 7
      %v243 = vsub.s32 0, %v242
      %v244 = vrot.slane %v239, %v243
      %v246 = vmul.f32 %v237, %v244
      %v247 = vmul.f32 %v238, %v244
      %v248 = vld [vmem:[%s2] sm:$0x1]
      %v250 = vlaneseq
      %v251 = vshrl.u32 %v250, 7
      %v252 = vsub.s32 0, %v251
      %v253 = vrot.slane %v248, %v252
      %v255 = vadd.f32 %v246, %v253
      %v256 = vadd.f32 %v247, %v253
      %v257 = vmax.f32 %v255, 0.0
      %v258 = vmax.f32 %v256, 0.0
      %vm261 = vcmask 1040384
      %v262 = vrot.slane %v257, 7
      %v263 = vrot.slane %v258, 7
      %v264 = vsel %vm261, %v262, %v263
      %v268 = vsel %vm261, 0.0, %v262
      %v269 = vsel %vm261, %v263, 0.0
      %v270 = vpack.c.bf16 %v264, %v268
      %v271 = vld [vmem:[%s3] sm:$0xf]
      %v272 = vld [vmem:[%s3 + $0x4] sm:$0xf]
      %v273 = vld [vmem:[%s3 + $0x8] sm:$0xf]
      %v274 = vld [vmem:[%s3 + $0xc] sm:$0xf]
      %v275 = vld [vmem:[%s3 + $0x10] sm:$0xf]
      %v276 = vld [vmem:[%s3 + $0x14] sm:$0xf]
      %v277 = vld [vmem:[%s3 + $0x18] sm:$0xf]
      %v278 = vld [vmem:[%s3 + $0x1c] sm:$0xf]
      %v279 = vld [vmem:[%s3 + $0x20] sm:$0xf]
      %v280 = vld [vmem:[%s3 + $0x24] sm:$0xf]
      %v281 = vld [vmem:[%s3 + $0x28] sm:$0xf]
      %v282 = vld [vmem:[%s3 + $0x2c] sm:$0xf]
      %v283 = vld [vmem:[%s3 + $0x30] sm:$0xf]
      %v284 = vld [vmem:[%s3 + $0x34] sm:$0xf]
      %v285 = vld [vmem:[%s3 + $0x38] sm:$0xf]
      %v286 = vld [vmem:[%s3 + $0x3c] sm:$0xf]
      %v287 = vpack.c.bf16 %v269, %v269
      %s288 = scalar_lea.vmem %s3, 64
      %v289 = vld [vmem:[%s288] sm:$0xf]
      %v290 = vld [vmem:[%s288 + $0x4] sm:$0xf]
      %v291 = vld [vmem:[%s288 + $0x8] sm:$0xf]
      %v292 = vld [vmem:[%s288 + $0xc] sm:$0xf]
      %v293 = vld [vmem:[%s288 + $0x10] sm:$0xf]
      %v294 = vld [vmem:[%s288 + $0x14] sm:$0xf]
      %v295 = vld [vmem:[%s288 + $0x18] sm:$0xf]
      %v296 = vld [vmem:[%s288 + $0x1c] sm:$0xf]
      %v297 = vld [vmem:[%s288 + $0x20] sm:$0xf]
      %v298 = vld [vmem:[%s288 + $0x24] sm:$0xf]
      %v299 = vld [vmem:[%s288 + $0x28] sm:$0xf]
      %v300 = vld [vmem:[%s288 + $0x2c] sm:$0xf]
      %v301 = vld [vmem:[%s288 + $0x30] sm:$0xf]
      %v302 = vld [vmem:[%s288 + $0x34] sm:$0xf]
      %v303 = vld [vmem:[%s288 + $0x38] sm:$0xf]
      %v304 = vld [vmem:[%s288 + $0x3c] sm:$0xf]
      %vm305 = vsmask.f32 7424
      %v307 = vshrl.u32 %v270, 16
      %v309 = vshll.u32 %v270, 16
      %v311 = vrot.slane %v309, 1
      %v312 = vor.u32 %v307, %v311
      %v314 = vshll.u32 %v287, 16
      %v316 = vrot.slane %v314, 1
      %v317 = vsel %vm305, %v312, %v316
      %v335 = vunpack.c.l.b16 %v289
      %v336 = vunpack.c.l.b16 %v290
      %v337 = vunpack.c.l.b16 %v291
      %v338 = vunpack.c.l.b16 %v292
      %v339 = vunpack.c.l.b16 %v293
      %v340 = vunpack.c.l.b16 %v294
      %v341 = vunpack.c.l.b16 %v295
      %v342 = vunpack.c.l.b16 %v296
      %v343 = vunpack.c.l.b16 %v297
      %v344 = vunpack.c.l.b16 %v298
      %v345 = vunpack.c.l.b16 %v299
      %v346 = vunpack.c.l.b16 %v300
      %v347 = vunpack.c.l.b16 %v301
      %v348 = vunpack.c.l.b16 %v302
      %v349 = vunpack.c.l.b16 %v303
      %v350 = vunpack.c.l.b16 %v304
      %v351 = vpack.c.b16 %v336, %v335
      %v352 = vpack.c.b16 %v338, %v337
      %v353 = vpack.c.b16 %v340, %v339
      %v354 = vpack.c.b16 %v342, %v341
      %v355 = vpack.c.b16 %v344, %v343
      %v356 = vpack.c.b16 %v346, %v345
      %v357 = vpack.c.b16 %v348, %v347
      %v358 = vpack.c.b16 %v350, %v349
      %367 = vmatprep.subr.bf16.mxu0 0
      %368 = vmatpush1.bf16.msra.mxu0 %v358
      %369 = vmatprep.subr.bf16.mxu0 0
      %370 = vmatpush1.bf16.msra.mxu0 %v357
      %371 = vmatprep.subr.bf16.mxu0 0
      %372 = vmatpush1.bf16.msra.mxu0 %v356
      %373 = vmatprep.subr.bf16.mxu0 0
      %374 = vmatpush1.bf16.msra.mxu0 %v355
      %375 = vmatprep.subr.bf16.mxu0 0
      %376 = vmatpush1.bf16.msra.mxu0 %v354
      %377 = vmatprep.subr.bf16.mxu0 0
      %378 = vmatpush1.bf16.msra.mxu0 %v353
      %379 = vmatprep.subr.bf16.mxu0 0
      %380 = vmatpush1.bf16.msra.mxu0 %v352
      %381 = vmatprep.subr.bf16.mxu0 0
      %382 = vmatpush1.bf16.msra.mxu0 %v351
      %383 = vmatprep.subr.bf16.mxu0 0
      %384 = vmatpush2.bf16.msra.mxu0 0
      %385 = vmatprep.subr.bf16.mxu0 0
      %386 = vmatpush2.bf16.msra.mxu0 0
      %387 = vmatprep.subr.bf16.mxu0 0
      %388 = vmatpush2.bf16.msra.mxu0 0
      %389 = vmatprep.subr.bf16.mxu0 0
      %390 = vmatpush2.bf16.msra.mxu0 0
      %391 = vmatprep.subr.bf16.mxu0 0
      %392 = vmatpush2.bf16.msra.mxu0 0
      %393 = vmatprep.subr.bf16.mxu0 0
      %394 = vmatpush2.bf16.msra.mxu0 0
      %395 = vmatprep.subr.bf16.mxu0 0
      %396 = vmatpush2.bf16.msra.mxu0 0
      %397 = vmatprep.subr.bf16.mxu0 0
      %398 = vmatpush2.bf16.msra.mxu0 0
      %399 = vmatprep.mubr.bf16.mxu0 0
      %400 = vmatmul.mubr.bf16.gmra.mxu0 %v317
      %v401 = vpop.f32.mrf.mxu0
      %v402 = vadd.f32 0.0, %v401
      %v403 = vpop.f32.mrf.mxu0
      %v404 = vpop.f32.mrf.mxu0
      %v405 = vadd.f32 0.0, %v404
      %v406 = vpop.f32.mrf.mxu0
      %407 = vdwg.mxu0
      %v424 = vunpack.c.l.b16 %v271
      %v425 = vunpack.c.l.b16 %v272
      %v426 = vunpack.c.l.b16 %v273
      %v427 = vunpack.c.l.b16 %v274
      %v428 = vunpack.c.l.b16 %v275
      %v429 = vunpack.c.l.b16 %v276
      %v430 = vunpack.c.l.b16 %v277
      %v431 = vunpack.c.l.b16 %v278
      %v432 = vunpack.c.l.b16 %v279
      %v433 = vunpack.c.l.b16 %v280
      %v434 = vunpack.c.l.b16 %v281
      %v435 = vunpack.c.l.b16 %v282
      %v436 = vunpack.c.l.b16 %v283
      %v437 = vunpack.c.l.b16 %v284
      %v438 = vunpack.c.l.b16 %v285
      %v439 = vunpack.c.l.b16 %v286
      %v440 = vpack.c.b16 %v425, %v424
      %v441 = vpack.c.b16 %v427, %v426
      %v442 = vpack.c.b16 %v429, %v428
      %v443 = vpack.c.b16 %v431, %v430
      %v444 = vpack.c.b16 %v433, %v432
      %v445 = vpack.c.b16 %v435, %v434
      %v446 = vpack.c.b16 %v437, %v436
      %v447 = vpack.c.b16 %v439, %v438
      %456 = vmatprep.subr.bf16.mxu0 0
      %457 = vmatpush1.bf16.msra.mxu0 %v447
      %458 = vmatprep.subr.bf16.mxu0 0
      %459 = vmatpush1.bf16.msra.mxu0 %v446
      %460 = vmatprep.subr.bf16.mxu0 0
      %461 = vmatpush1.bf16.msra.mxu0 %v445
      %462 = vmatprep.subr.bf16.mxu0 0
      %463 = vmatpush1.bf16.msra.mxu0 %v444
      %464 = vmatprep.subr.bf16.mxu0 0
      %465 = vmatpush1.bf16.msra.mxu0 %v443
      %466 = vmatprep.subr.bf16.mxu0 0
      %467 = vmatpush1.bf16.msra.mxu0 %v442
      %468 = vmatprep.subr.bf16.mxu0 0
      %469 = vmatpush1.bf16.msra.mxu0 %v441
      %470 = vmatprep.subr.bf16.mxu0 0
      %471 = vmatpush1.bf16.msra.mxu0 %v440
      %472 = vmatprep.subr.bf16.mxu0 0
      %473 = vmatpush2.bf16.msra.mxu0 0
      %474 = vmatprep.subr.bf16.mxu0 0
      %475 = vmatpush2.bf16.msra.mxu0 0
      %476 = vmatprep.subr.bf16.mxu0 0
      %477 = vmatpush2.bf16.msra.mxu0 0
      %478 = vmatprep.subr.bf16.mxu0 0
      %479 = vmatpush2.bf16.msra.mxu0 0
      %480 = vmatprep.subr.bf16.mxu0 0
      %481 = vmatpush2.bf16.msra.mxu0 0
      %482 = vmatprep.subr.bf16.mxu0 0
      %483 = vmatpush2.bf16.msra.mxu0 0
      %484 = vmatprep.subr.bf16.mxu0 0
      %485 = vmatpush2.bf16.msra.mxu0 0
      %486 = vmatprep.subr.bf16.mxu0 0
      %487 = vmatpush2.bf16.msra.mxu0 0
      %488 = vmatprep.mubr.bf16.mxu0 0
      %489 = vmatmul.mubr.bf16.gmra.mxu0 %v270
      %v490 = vpop.f32.mrf.mxu0
      %v491 = vadd.f32 %v402, %v490
      %v492 = vpop.f32.mrf.mxu0
      %v493 = vpop.f32.mrf.mxu0
      %v494 = vadd.f32 %v405, %v493
      %v495 = vpop.f32.mrf.mxu0
      %496 = vdwg.mxu0
      %s497 = scalar_lea.vmem %s3, 128
      %v498 = vld [vmem:[%s497] sm:$0xf]
      %v499 = vld [vmem:[%s497 + $0x4] sm:$0xf]
      %v500 = vld [vmem:[%s497 + $0x8] sm:$0xf]
      %v501 = vld [vmem:[%s497 + $0xc] sm:$0xf]
      %v502 = vld [vmem:[%s497 + $0x10] sm:$0xf]
      %v503 = vld [vmem:[%s497 + $0x14] sm:$0xf]
      %v504 = vld [vmem:[%s497 + $0x18] sm:$0xf]
      %v505 = vld [vmem:[%s497 + $0x1c] sm:$0xf]
      %v506 = vld [vmem:[%s497 + $0x20] sm:$0xf]
      %v507 = vld [vmem:[%s497 + $0x24] sm:$0xf]
      %v508 = vld [vmem:[%s497 + $0x28] sm:$0xf]
      %v509 = vld [vmem:[%s497 + $0x2c] sm:$0xf]
      %v510 = vld [vmem:[%s497 + $0x30] sm:$0xf]
      %v511 = vld [vmem:[%s497 + $0x34] sm:$0xf]
      %v512 = vld [vmem:[%s497 + $0x38] sm:$0xf]
      %v513 = vld [vmem:[%s497 + $0x3c] sm:$0xf]
      %vm516 = vcmask 1046528
      %v517 = vrot.slane %v270, 1
      %v518 = vrot.slane %v287, 1
      %v519 = vsel %vm516, %v517, %v518
      %v537 = vunpack.c.l.b16 %v498
      %v538 = vunpack.c.l.b16 %v499
      %v539 = vunpack.c.l.b16 %v500
      %v540 = vunpack.c.l.b16 %v501
      %v541 = vunpack.c.l.b16 %v502
      %v542 = vunpack.c.l.b16 %v503
      %v543 = vunpack.c.l.b16 %v504
      %v544 = vunpack.c.l.b16 %v505
      %v545 = vunpack.c.l.b16 %v506
      %v546 = vunpack.c.l.b16 %v507
      %v547 = vunpack.c.l.b16 %v508
      %v548 = vunpack.c.l.b16 %v509
      %v549 = vunpack.c.l.b16 %v510
      %v550 = vunpack.c.l.b16 %v511
      %v551 = vunpack.c.l.b16 %v512
      %v552 = vunpack.c.l.b16 %v513
      %v553 = vpack.c.b16 %v538, %v537
      %v554 = vpack.c.b16 %v540, %v539
      %v555 = vpack.c.b16 %v542, %v541
      %v556 = vpack.c.b16 %v544, %v543
      %v557 = vpack.c.b16 %v546, %v545
      %v558 = vpack.c.b16 %v548, %v547
      %v559 = vpack.c.b16 %v550, %v549
      %v560 = vpack.c.b16 %v552, %v551
      %569 = vmatprep.subr.bf16.mxu0 0
      %570 = vmatpush1.bf16.msra.mxu0 %v560
      %571 = vmatprep.subr.bf16.mxu0 0
      %572 = vmatpush1.bf16.msra.mxu0 %v559
      %573 = vmatprep.subr.bf16.mxu0 0
      %574 = vmatpush1.bf16.msra.mxu0 %v558
      %575 = vmatprep.subr.bf16.mxu0 0
      %576 = vmatpush1.bf16.msra.mxu0 %v557
      %577 = vmatprep.subr.bf16.mxu0 0
      %578 = vmatpush1.bf16.msra.mxu0 %v556
      %579 = vmatprep.subr.bf16.mxu0 0
      %580 = vmatpush1.bf16.msra.mxu0 %v555
      %581 = vmatprep.subr.bf16.mxu0 0
      %582 = vmatpush1.bf16.msra.mxu0 %v554
      %583 = vmatprep.subr.bf16.mxu0 0
      %584 = vmatpush1.bf16.msra.mxu0 %v553
      %585 = vmatprep.subr.bf16.mxu0 0
      %586 = vmatpush2.bf16.msra.mxu0 0
      %587 = vmatprep.subr.bf16.mxu0 0
      %588 = vmatpush2.bf16.msra.mxu0 0
      %589 = vmatprep.subr.bf16.mxu0 0
      %590 = vmatpush2.bf16.msra.mxu0 0
      %591 = vmatprep.subr.bf16.mxu0 0
      %592 = vmatpush2.bf16.msra.mxu0 0
      %593 = vmatprep.subr.bf16.mxu0 0
      %594 = vmatpush2.bf16.msra.mxu0 0
      %595 = vmatprep.subr.bf16.mxu0 0
      %596 = vmatpush2.bf16.msra.mxu0 0
      %597 = vmatprep.subr.bf16.mxu0 0
      %598 = vmatpush2.bf16.msra.mxu0 0
      %599 = vmatprep.subr.bf16.mxu0 0
      %600 = vmatpush2.bf16.msra.mxu0 0
      %601 = vmatprep.mubr.bf16.mxu0 0
      %602 = vmatmul.mubr.bf16.gmra.mxu0 %v519
      %v603 = vpop.f32.mrf.mxu0
      %v604 = vadd.f32 0.0, %v603
      %v605 = vpop.f32.mrf.mxu0
      %v606 = vpop.f32.mrf.mxu0
      %v607 = vadd.f32 0.0, %v606
      %v608 = vpop.f32.mrf.mxu0
      %609 = vdwg.mxu0
      %v610 = vadd.f32 %v491, %v604
      %v611 = vadd.f32 %v494, %v607
      %v612 = vadd.f32 %v610, %v611
      %v613 = vrot.slane %v612, 4
      %v614 = vadd.f32 %v612, %v613
      %v615 = vrot.slane %v614, 2
      %v616 = vadd.f32 %v614, %v615
      %v617 = vrot.slane %v616, 1
      %v618 = vadd.f32 %v616, %v617
      %v619 = vmul.f32 %v610, %v610
      %v620 = vmul.f32 %v611, %v611
      %v621 = vadd.f32 %v619, %v620
      %v622 = vrot.slane %v621, 4
      %v623 = vadd.f32 %v621, %v622
      %v624 = vrot.slane %v623, 2
      %v625 = vadd.f32 %v623, %v624
      %v626 = vrot.slane %v625, 1
      %v627 = vadd.f32 %v625, %v626
      %v628 = vsel %vm261, %v618, %v627
      %629 = vst [vmem:[%s235] sm:$0x3] %v628
      %630 = vst [vmem:[%s231] sm:$0xff] %v610
      %631 = vst [vmem:[%s231 + $0x8] sm:$0xff] %v611
      %p632 = scmp.lt.s32.totalorder %s17, 1
      %s633 = scalar_select %p632, %s17, 1
      %s634 = smul.addr %s633, 2
      %s635 = smul.addr %s634, 8
      %s636 = scalar_lea.vmem %s4, %s635
      %p637 = scmp.lt.s32.totalorder %s17, 1
      %s638 = scalar_select %p637, %s17, 1
      %s639 = smul.addr %s638, 2
      %s640 = scalar_lea.vmem %s5, %s639
      // Predicated region
      $region37: #{double_conv2d.4} parent=35 // pred_check
        %p641 = pneg %p124
      $region38: #{double_conv2d.4} parent=35 // pred_check_branch
        %643 = sbr.rel (%p641) target = $region40
      $region39: #{double_conv2d.4} parent=35 // pred_region
        _
      $region40: #{double_conv2d.4} parent=35 // pred_fallthru
        _
      // Predicated region
      $region41: #{double_conv2d.4} parent=35 // pred_check
        %p644 = pneg %p150
      $region42: #{double_conv2d.4} parent=35 // pred_check_branch
        %646 = sbr.rel (%p644) target = $region44
      $region43: #{double_conv2d.4} parent=35 // pred_region
        _
      $region44: #{double_conv2d.4} parent=35 // pred_fallthru
        _
    $region36: #{double_conv2d.4} parent=5 // pred_fallthru
      _
    %p647 = scmp.le.s32.totalorder 2, %s12
    // Predicated region
    $region45: #{double_conv2d.4} parent=5 // pred_check
      %p648 = pneg %p647
    $region46: #{double_conv2d.4} parent=5 // pred_check_branch
      %650 = sbr.rel (%p648) target = $region48
    $region47: #{double_conv2d.4} parent=5 // pred_region
      %s651 = ssub.s32 %s12, 2
      // Predicated region
      $region49: #{double_conv2d.4} parent=47 // pred_check
        %p652 = pneg %p130
      $region50: #{double_conv2d.4} parent=47 // pred_check_branch
        %654 = sbr.rel (%p652) target = $region52
      $region51: #{double_conv2d.4} parent=47 // pred_region
        %p655 = scmp.lt.s32.totalorder %s18, 1
        %s656 = scalar_select %p655, %s18, 1
        %s657 = smul.addr %s656, 2
        %s658 = smul.addr %s657, 8
        %s659 = scalar_lea.vmem %s4, %s658
      $region52: #{double_conv2d.4} parent=47 // pred_fallthru
        _
      // Predicated region
      $region53: #{double_conv2d.4} parent=47 // pred_check
        %p660 = pneg %p156
      $region54: #{double_conv2d.4} parent=47 // pred_check_branch
        %662 = sbr.rel (%p660) target = $region56
      $region55: #{double_conv2d.4} parent=47 // pred_region
        %p663 = scmp.lt.s32.totalorder %s18, 1
        %s664 = scalar_select %p663, %s18, 1
        %s665 = smul.addr %s664, 2
        %s666 = scalar_lea.vmem %s5, %s665
      $region56: #{double_conv2d.4} parent=47 // pred_fallthru
        _
    $region48: #{double_conv2d.4} parent=5 // pred_fallthru
      _
  $region6: #{double_conv2d.4} parent=0 // loop_footer
    %s16 = sadd.s32 1, %s12
  $region7: #{double_conv2d.4} parent=0 // loop_footer_branch
    %11 = sbr.rel target = $region3
  $region8: #{double_conv2d.4} parent=0 // loop_exit
    _

</llo_original>
